<compile_context>
chip_gen: v5e
topology: v5e:2x2
jax: 0.10.0
libtpu: 0.0.40
codegen_flags: <defaults>
</compile_context>

<pallas_src>
import functools

import jax
import jax.numpy as jnp
from jax import lax
from jax.experimental import pallas as pl
from jax.experimental.pallas import tpu as pltpu


# ------------------------------ fused kernel -------------------------------- #

def _stem_kernel(xu_ref, w_ref, b_ref, o_ref, *, ho, wo4, cout):
    """Fused conv(7x7,s2)+BN+ReLU+maxpool(3x3,s2) for one image.

    xu_ref: ((ho+3)*wo4, 64*cin)   s2d + width-unfolded + 4-column-packed input (bf16)
    w_ref : (4, 64*cin, 4*cout)    block-diagonal, BN-scale-folded weights (one per row tap)
    b_ref : (1, 4*cout)            BN bias, replicated over the 4 packed columns (f32)
    o_ref : ((ho//2)*wo4, 2*cout)  pooled output: 2 pooled columns x cout channels per row
    """
    m4 = ho * wo4                            # packed conv rows (4 output columns each)

    # --- conv + BN(scale folded) + ReLU: 4 accumulated MXU matmuls ---------------
    acc = jnp.zeros((m4, 4 * cout), jnp.float32)
    for di in range(4):                      # static unroll over kernel-row taps
        lhs = xu_ref[pl.ds(di * wo4, m4), :]             # contiguous row slice, no relayout
        acc = acc + jnp.dot(lhs, w_ref[di], preferred_element_type=jnp.float32)
    y = jnp.maximum(acc + b_ref[...], 0.0)               # (m4, 4*cout) f32

    # --- maxpool, width direction (window 3, stride 2, left zero-pad; safe post-ReLU) ---
    q0 = y[:, 0 * cout:1 * cout]             # conv column 4*j4
    q1 = y[:, 1 * cout:2 * cout]             # conv column 4*j4 + 1
    q2 = y[:, 2 * cout:3 * cout]             # conv column 4*j4 + 2
    q3 = y[:, 3 * cout:4 * cout]             # conv column 4*j4 + 3
    # conv column 4*j4 - 1 lives in the previous packed row's q3; zero at the left image edge.
    q3s = jnp.concatenate([jnp.zeros((1, cout), jnp.float32), q3[:-1, :]], axis=0)
    row_idx = lax.broadcasted_iota(jnp.int32, (m4, 1), 0)
    q3s = jnp.where(row_idx % wo4 == 0, 0.0, q3s)
    p_even = jnp.maximum(jnp.maximum(q3s, q0), q1)       # pooled column 2*j4
    p_odd = jnp.maximum(jnp.maximum(q1, q2), q3)         # pooled column 2*j4 + 1

    # --- maxpool, height direction (window 3, stride 2, top zero-pad) ------------
    def pool_rows(c):
        c = c.reshape(ho // 2, 2, wo4, cout)
        e, o = c[:, 0], c[:, 1]                           # conv rows 2*pr, 2*pr + 1
        osh = jnp.concatenate(                            # conv row 2*pr - 1
            [jnp.zeros((1, wo4, cout), jnp.float32), o[:-1]], axis=0)
        return jnp.maximum(jnp.maximum(osh, e), o)        # (ho//2, wo4, cout)

    out = jnp.concatenate([pool_rows(p_even), pool_rows(p_odd)], axis=-1)  # (ho//2, wo4, 2*cout)
    o_ref[...] = out.reshape((ho // 2) * wo4, 2 * cout)


# --------------------------------- wrapper ----------------------------------- #

def thermal_module_forward(x_nchw, w_oihw, gamma, beta, run_mean, run_var,
                           eps=1e-5, mxu_dtype=jnp.bfloat16):
    N, Cin, H, W = x_nchw.shape
    Cout, _, KH, KW = w_oihw.shape
    assert (KH, KW) == (7, 7)

    Ho = (H + 2 * 3 - 7) // 2 + 1
    Wo = (W + 2 * 3 - 7) // 2 + 1
    # TODO(synk): general spatial sizes; the fused pool layout assumes these (true for the
    # ResNet stem's usual 32/64/128/224 inputs).
    assert Ho % 2 == 0 and Wo % 4 == 0, "fused kernel needs Ho % 2 == 0 and Wo % 4 == 0"
    Ho2, Wo2, Wo4 = Ho // 2, Wo // 2, Wo // 4
    Hp2, Wp2 = Ho + 3, Wo + 3
    K1 = 16 * Cin                      # per-row-tap contraction: 4 col taps x 4 s2d phases x Cin

    # ---- glue (all ~input-sized): NHWC, pad, space-to-depth, width unfold, 4-col pack ----
    x = jnp.transpose(x_nchw, (0, 2, 3, 1))                               # NCHW -> NHWC
    xp = jnp.pad(x, ((0, 0), (3, 2 * Hp2 - H - 3), (3, 2 * Wp2 - W - 3), (0, 0)))
    xs = xp.reshape(N, Hp2, 2, Wp2, 2, Cin)
    xs = jnp.transpose(xs, (0, 1, 3, 2, 4, 5)).reshape(N, Hp2, Wp2, 4 * Cin)   # s2d, (a,b,ci)
    xu = jnp.concatenate([xs[:, :, dj:dj + Wo, :] for dj in range(4)], axis=-1)  # (N,Hp2,Wo,K1)
    xu = xu.reshape(N, Hp2, Wo4, 4 * K1).reshape(N, Hp2 * Wo4, 4 * K1)
    xu = xu.astype(mxu_dtype)

    # ---- weights: reorder to (di, dj, row-phase, col-phase, cin), fold BN scale ----------
    inv_std = lax.rsqrt(run_var.astype(jnp.float32) + eps)
    scale = gamma * inv_std                                               # (Cout,)
    bias = beta - run_mean * scale                                        # (Cout,)
    w_hwio = jnp.transpose(w_oihw, (2, 3, 1, 0))                          # (7,7,Cin,Cout)
    w_pad = jnp.pad(w_hwio, ((0, 1), (0, 1), (0, 0), (0, 0)))             # (8,8,Cin,Cout)
    w6 = w_pad.reshape(4, 2, 4, 2, Cin, Cout)                             # (di,a,dj,b,ci,co)
    w6 = jnp.transpose(w6, (0, 2, 1, 3, 4, 5))                            # (di,dj,a,b,ci,co)
    w2 = w6.reshape(4, K1, Cout) * scale[None, None, :]
    # block-diagonal: 4 packed conv columns per matmul row -> 4*Cout lane-dense MXU output
    w4 = jnp.einsum('pq,dkc->dpkqc', jnp.eye(4, dtype=w2.dtype), w2)
    w4 = w4.reshape(4, 4 * K1, 4 * Cout).astype(mxu_dtype)
    bias4 = jnp.tile(bias, 4).reshape(1, 4 * Cout).astype(jnp.float32)

    m2 = Ho2 * Wo4
    out_packed = pl.pallas_call(
        functools.partial(_stem_kernel, ho=Ho, wo4=Wo4, cout=Cout),
        out_shape=jax.ShapeDtypeStruct((N, m2, 2 * Cout), jnp.float32),
        grid=(N,),
        in_specs=[
            pl.BlockSpec((None, Hp2 * Wo4, 4 * K1), lambda n: (n, 0, 0)),   # per-image block
            pl.BlockSpec((4, 4 * K1, 4 * Cout), lambda n: (0, 0, 0)),        # resident weights
            pl.BlockSpec((1, 4 * Cout), lambda n: (0, 0)),                   # resident bias
        ],
        out_specs=pl.BlockSpec((None, m2, 2 * Cout), lambda n: (n, 0, 0)),
        compiler_params=pltpu.CompilerParams(
            dimension_semantics=("parallel",)),
    )(xu, w4, bias4)

    # unpack lane-dense output: (N, Ho2*Wo4, 2*Cout) -> (N, Ho2, Wo2, Cout) -> NCHW
    out = out_packed.reshape(N, Ho2, Wo4, 2, Cout).reshape(N, Ho2, Wo2, Cout)
    return jnp.transpose(out, (0, 3, 1, 2))


# ----------------------- pure-JAX reference (for check) ---------------------- #

def reference_forward(x_nchw, w_oihw, gamma, beta, run_mean, run_var,
                      eps=1e-5, conv_dtype=jnp.float32):
    x = jnp.transpose(x_nchw, (0, 2, 3, 1)).astype(conv_dtype)
    w_hwio = jnp.transpose(w_oihw, (2, 3, 1, 0)).astype(conv_dtype)
    y = lax.conv_general_dilated(
        x, w_hwio, window_strides=(2, 2), padding=((3, 3), (3, 3)),
        dimension_numbers=("NHWC", "HWIO", "NHWC"),
        preferred_element_type=jnp.float32)
    inv_std = lax.rsqrt(run_var + eps)
    y = (y - run_mean) * inv_std * gamma + beta
    y = jnp.maximum(y, 0.0)
    y = lax.reduce_window(
        y, -jnp.inf, lax.max,
        window_dimensions=(1, 3, 3, 1), window_strides=(1, 2, 2, 1),
        padding=((0, 0), (1, 1), (1, 1), (0, 0)))
    return jnp.transpose(y, (0, 3, 1, 2))


# ----------------------------------- main ------------------------------------ #

if __name__ == "__main__":
    key = jax.random.PRNGKey(0)
    k_x, k_w, k_g, k_b, k_m, k_v = jax.random.split(key, 6)

    N, Cin, H, W = 2, 3, 32, 32
    Cout, KH, KW = 64, 7, 7

    x = jax.random.normal(k_x, (N, Cin, H, W), dtype=jnp.float32)
    conv1_w = jax.random.normal(k_w, (Cout, Cin, KH, KW), dtype=jnp.float32) * 0.05
    bn_gamma = jax.random.uniform(k_g, (Cout,), minval=0.5, maxval=1.5, dtype=jnp.float32)
    bn_beta = jax.random.normal(k_b, (Cout,), dtype=jnp.float32) * 0.1
    bn_mean = jax.random.normal(k_m, (Cout,), dtype=jnp.float32) * 0.1
    bn_var = jax.random.uniform(k_v, (Cout,), minval=0.5, maxval=1.5, dtype=jnp.float32)

    fwd = jax.jit(thermal_module_forward)
    out = jax.block_until_ready(fwd(x, conv1_w, bn_gamma, bn_beta, bn_mean, bn_var))

    # Reference with matching (bf16) MXU operand precision, f32 accumulation.
    ref = jax.block_until_ready(reference_forward(
        x, conv1_w, bn_gamma, bn_beta, bn_mean, bn_var, conv_dtype=jnp.bfloat16))

    assert out.shape == (N, Cout, 8, 8), out.shape
    assert jnp.allclose(out, ref, atol=2e-2, rtol=2e-2), (
        "mismatch vs reference: max abs diff = %g" % float(jnp.max(jnp.abs(out - ref))))

    print("KERNEL_OK")
</pallas_src>

<mosaic_0001>
module attributes {stable_mosaic.version = 11 : i64} {
  func.func @_stem_kernel(%arg0: i32, %arg1: memref<1x76x192xbf16, #tpu.memory_space<vmem>>, %arg2: memref<4x192x256xbf16, #tpu.memory_space<vmem>>, %arg3: memref<1x256xf32, #tpu.memory_space<vmem>>, %arg4: memref<1x32x128xf32, #tpu.memory_space<vmem>>) attributes {dimension_semantics = [#tpu.dimension_semantics<parallel>], iteration_bounds = array<i64: 2>, scalar_prefetch = 0 : i64, scratch_operands = 0 : i64, tpu.core_type = #tpu.core_type<tc>, window_params = [{transform_indices = @transform_0, window_bounds = array<i64: 1, 76, 192>}, {pipeline_mode = #tpu.pipeline_mode<synchronous>, transform_indices = @transform_1, window_bounds = array<i64: 4, 192, 256>}, {pipeline_mode = #tpu.pipeline_mode<synchronous>, transform_indices = @transform_2, window_bounds = array<i64: 1, 256>}, {transform_indices = @transform_3, window_bounds = array<i64: 1, 32, 128>}]} {
    %cst = arith.constant 0.000000e+00 : f32
    %0 = vector.broadcast %cst : f32 to vector<64x256xf32>
    %c0 = arith.constant 0 : index
    %c0_0 = arith.constant 0 : index
    %c0_1 = arith.constant 0 : index
    %1 = vector.load %arg1[%c0, %c0_0, %c0_1] : memref<1x76x192xbf16, #tpu.memory_space<vmem>>, vector<1x64x192xbf16>
    %2 = vector.shape_cast %1 : vector<1x64x192xbf16> to vector<64x192xbf16>
    %c0_2 = arith.constant 0 : index
    %c0_3 = arith.constant 0 : index
    %c0_4 = arith.constant 0 : index
    %3 = vector.load %arg2[%c0_2, %c0_3, %c0_4] : memref<4x192x256xbf16, #tpu.memory_space<vmem>>, vector<1x192x256xbf16>
    %4 = vector.shape_cast %3 : vector<1x192x256xbf16> to vector<192x256xbf16>
    %cst_5 = arith.constant dense<0.000000e+00> : vector<64x256xf32>
    %5 = tpu.matmul %2, %4, %cst_5 {dimension_numbers = #tpu.dot_dimension_numbers<[1], [0], [0], [1], [0, 0, 1, 1], [], []>} : vector<64x192xbf16>, vector<192x256xbf16>, vector<64x256xf32> -> vector<64x256xf32>
    %6 = arith.addf %0, %5 : vector<64x256xf32>
    %c0_6 = arith.constant 0 : index
    %c4 = arith.constant 4 : index
    %c0_7 = arith.constant 0 : index
    %7 = vector.load %arg1[%c0_6, %c4, %c0_7] : memref<1x76x192xbf16, #tpu.memory_space<vmem>>, vector<1x64x192xbf16>
    %8 = vector.shape_cast %7 : vector<1x64x192xbf16> to vector<64x192xbf16>
    %c1 = arith.constant 1 : index
    %c0_8 = arith.constant 0 : index
    %c0_9 = arith.constant 0 : index
    %9 = vector.load %arg2[%c1, %c0_8, %c0_9] : memref<4x192x256xbf16, #tpu.memory_space<vmem>>, vector<1x192x256xbf16>
    %10 = vector.shape_cast %9 : vector<1x192x256xbf16> to vector<192x256xbf16>
    %cst_10 = arith.constant dense<0.000000e+00> : vector<64x256xf32>
    %11 = tpu.matmul %8, %10, %cst_10 {dimension_numbers = #tpu.dot_dimension_numbers<[1], [0], [0], [1], [0, 0, 1, 1], [], []>} : vector<64x192xbf16>, vector<192x256xbf16>, vector<64x256xf32> -> vector<64x256xf32>
    %12 = arith.addf %6, %11 : vector<64x256xf32>
    %c0_11 = arith.constant 0 : index
    %c8 = arith.constant 8 : index
    %c0_12 = arith.constant 0 : index
    %13 = vector.load %arg1[%c0_11, %c8, %c0_12] : memref<1x76x192xbf16, #tpu.memory_space<vmem>>, vector<1x64x192xbf16>
    %14 = vector.shape_cast %13 : vector<1x64x192xbf16> to vector<64x192xbf16>
    %c2 = arith.constant 2 : index
    %c0_13 = arith.constant 0 : index
    %c0_14 = arith.constant 0 : index
    %15 = vector.load %arg2[%c2, %c0_13, %c0_14] : memref<4x192x256xbf16, #tpu.memory_space<vmem>>, vector<1x192x256xbf16>
    %16 = vector.shape_cast %15 : vector<1x192x256xbf16> to vector<192x256xbf16>
    %cst_15 = arith.constant dense<0.000000e+00> : vector<64x256xf32>
    %17 = tpu.matmul %14, %16, %cst_15 {dimension_numbers = #tpu.dot_dimension_numbers<[1], [0], [0], [1], [0, 0, 1, 1], [], []>} : vector<64x192xbf16>, vector<192x256xbf16>, vector<64x256xf32> -> vector<64x256xf32>
    %18 = arith.addf %12, %17 : vector<64x256xf32>
    %c0_16 = arith.constant 0 : index
    %c12 = arith.constant 12 : index
    %c0_17 = arith.constant 0 : index
    %19 = vector.load %arg1[%c0_16, %c12, %c0_17] : memref<1x76x192xbf16, #tpu.memory_space<vmem>>, vector<1x64x192xbf16>
    %20 = vector.shape_cast %19 : vector<1x64x192xbf16> to vector<64x192xbf16>
    %c3 = arith.constant 3 : index
    %c0_18 = arith.constant 0 : index
    %c0_19 = arith.constant 0 : index
    %21 = vector.load %arg2[%c3, %c0_18, %c0_19] : memref<4x192x256xbf16, #tpu.memory_space<vmem>>, vector<1x192x256xbf16>
    %22 = vector.shape_cast %21 : vector<1x192x256xbf16> to vector<192x256xbf16>
    %cst_20 = arith.constant dense<0.000000e+00> : vector<64x256xf32>
    %23 = tpu.matmul %20, %22, %cst_20 {dimension_numbers = #tpu.dot_dimension_numbers<[1], [0], [0], [1], [0, 0, 1, 1], [], []>} : vector<64x192xbf16>, vector<192x256xbf16>, vector<64x256xf32> -> vector<64x256xf32>
    %24 = arith.addf %18, %23 : vector<64x256xf32>
    %c0_21 = arith.constant 0 : index
    %c0_22 = arith.constant 0 : index
    %25 = vector.load %arg3[%c0_21, %c0_22] : memref<1x256xf32, #tpu.memory_space<vmem>>, vector<1x256xf32>
    %26 = vector.broadcast %25 : vector<1x256xf32> to vector<64x256xf32>
    %27 = arith.addf %24, %26 : vector<64x256xf32>
    %cst_23 = arith.constant 0.000000e+00 : f32
    %28 = vector.broadcast %cst_23 : f32 to vector<64x256xf32>
    %29 = arith.maximumf %27, %28 : vector<64x256xf32>
    %30 = vector.extract_strided_slice %29 {offsets = [0, 0], sizes = [64, 64], strides = [1, 1]} : vector<64x256xf32> to vector<64x64xf32>
    %31 = vector.extract_strided_slice %29 {offsets = [0, 64], sizes = [64, 64], strides = [1, 1]} : vector<64x256xf32> to vector<64x64xf32>
    %32 = vector.extract_strided_slice %29 {offsets = [0, 128], sizes = [64, 64], strides = [1, 1]} : vector<64x256xf32> to vector<64x64xf32>
    %33 = vector.extract_strided_slice %29 {offsets = [0, 192], sizes = [64, 64], strides = [1, 1]} : vector<64x256xf32> to vector<64x64xf32>
    %cst_24 = arith.constant 0.000000e+00 : f32
    %34 = vector.broadcast %cst_24 : f32 to vector<1x64xf32>
    %35 = vector.extract_strided_slice %33 {offsets = [0, 0], sizes = [63, 64], strides = [1, 1]} : vector<64x64xf32> to vector<63x64xf32>
    %36 = tpu.concatenate %34, %35 in 0 : vector<1x64xf32>, vector<63x64xf32> -> vector<64x64xf32>
    %37 = tpu.iota {dimensions = array<i32: 0>} : vector<64x1xi32>
    %c4_i32 = arith.constant 4 : i32
    %c0_i32 = arith.constant 0 : i32
    %38 = arith.cmpi eq, %c4_i32, %c0_i32 : i32
    %c1_i32 = arith.constant 1 : i32
    %39 = arith.select %38, %c1_i32, %c4_i32 : i32
    %40 = vector.broadcast %39 : i32 to vector<64x1xi32>
    %41 = arith.remsi %37, %40 : vector<64x1xi32>
    %c0_i32_25 = arith.constant 0 : i32
    %42 = vector.broadcast %c0_i32_25 : i32 to vector<64x1xi32>
    %43 = arith.cmpi ne, %41, %42 : vector<64x1xi32>
    %c0_i32_26 = arith.constant 0 : i32
    %44 = vector.broadcast %c0_i32_26 : i32 to vector<64x1xi32>
    %45 = arith.cmpi slt, %41, %44 : vector<64x1xi32>
    %c0_i32_27 = arith.constant 0 : i32
    %46 = arith.cmpi slt, %39, %c0_i32_27 : i32
    %47 = vector.broadcast %46 : i1 to vector<64x1xi1>
    %48 = vector.broadcast %47 : vector<64x1xi1> to vector<64x1xi1>
    %49 = arith.xori %45, %48 : vector<64x1xi1>
    %50 = arith.andi %49, %43 : vector<64x1xi1>
    %51 = vector.broadcast %39 : i32 to vector<64x1xi32>
    %52 = arith.addi %41, %51 : vector<64x1xi32>
    %53 = arith.select %50, %52, %41 : vector<64x1xi1>, vector<64x1xi32>
    %c0_i32_28 = arith.constant 0 : i32
    %54 = vector.broadcast %c0_i32_28 : i32 to vector<64x1xi32>
    %55 = arith.cmpi eq, %53, %54 : vector<64x1xi32>
    %cst_29 = arith.constant 0.000000e+00 : f32
    %56 = vector.shape_cast %55 : vector<64x1xi1> to vector<64x1xi1>
    %57 = vector.broadcast %56 : vector<64x1xi1> to vector<64x64xi1>
    %58 = vector.broadcast %cst_29 : f32 to vector<64x64xf32>
    %59 = arith.select %57, %58, %36 : vector<64x64xi1>, vector<64x64xf32>
    %60 = arith.maximumf %59, %30 : vector<64x64xf32>
    %61 = arith.maximumf %60, %31 : vector<64x64xf32>
    %62 = arith.maximumf %31, %32 : vector<64x64xf32>
    %63 = arith.maximumf %62, %33 : vector<64x64xf32>
    %64 = vector.shape_cast %61 : vector<64x64xf32> to vector<8x2x4x64xf32>
    %65 = vector.extract_strided_slice %64 {offsets = [0, 0, 0, 0], sizes = [8, 1, 4, 64], strides = [1, 1, 1, 1]} : vector<8x2x4x64xf32> to vector<8x1x4x64xf32>
    %66 = vector.shape_cast %65 : vector<8x1x4x64xf32> to vector<8x4x64xf32>
    %67 = vector.extract_strided_slice %64 {offsets = [0, 1, 0, 0], sizes = [8, 1, 4, 64], strides = [1, 1, 1, 1]} : vector<8x2x4x64xf32> to vector<8x1x4x64xf32>
    %68 = vector.shape_cast %67 : vector<8x1x4x64xf32> to vector<8x4x64xf32>
    %cst_30 = arith.constant 0.000000e+00 : f32
    %69 = vector.broadcast %cst_30 : f32 to vector<1x4x64xf32>
    %70 = vector.extract_strided_slice %68 {offsets = [0, 0, 0], sizes = [7, 4, 64], strides = [1, 1, 1]} : vector<8x4x64xf32> to vector<7x4x64xf32>
    %71 = tpu.concatenate %69, %70 in 0 : vector<1x4x64xf32>, vector<7x4x64xf32> -> vector<8x4x64xf32>
    %72 = arith.maximumf %71, %66 : vector<8x4x64xf32>
    %73 = arith.maximumf %72, %68 : vector<8x4x64xf32>
    %74 = vector.shape_cast %63 : vector<64x64xf32> to vector<8x2x4x64xf32>
    %75 = vector.extract_strided_slice %74 {offsets = [0, 0, 0, 0], sizes = [8, 1, 4, 64], strides = [1, 1, 1, 1]} : vector<8x2x4x64xf32> to vector<8x1x4x64xf32>
    %76 = vector.shape_cast %75 : vector<8x1x4x64xf32> to vector<8x4x64xf32>
    %77 = vector.extract_strided_slice %74 {offsets = [0, 1, 0, 0], sizes = [8, 1, 4, 64], strides = [1, 1, 1, 1]} : vector<8x2x4x64xf32> to vector<8x1x4x64xf32>
    %78 = vector.shape_cast %77 : vector<8x1x4x64xf32> to vector<8x4x64xf32>
    %cst_31 = arith.constant 0.000000e+00 : f32
    %79 = vector.broadcast %cst_31 : f32 to vector<1x4x64xf32>
    %80 = vector.extract_strided_slice %78 {offsets = [0, 0, 0], sizes = [7, 4, 64], strides = [1, 1, 1]} : vector<8x4x64xf32> to vector<7x4x64xf32>
    %81 = tpu.concatenate %79, %80 in 0 : vector<1x4x64xf32>, vector<7x4x64xf32> -> vector<8x4x64xf32>
    %82 = arith.maximumf %81, %76 : vector<8x4x64xf32>
    %83 = arith.maximumf %82, %78 : vector<8x4x64xf32>
    %84 = tpu.concatenate %73, %83 in 2 : vector<8x4x64xf32>, vector<8x4x64xf32> -> vector<8x4x128xf32>
    %85 = vector.shape_cast %84 : vector<8x4x128xf32> to vector<32x128xf32>
    %c0_32 = arith.constant 0 : index
    %c0_33 = arith.constant 0 : index
    %c0_34 = arith.constant 0 : index
    %86 = vector.load %arg4[%c0_32, %c0_33, %c0_34] : memref<1x32x128xf32, #tpu.memory_space<vmem>>, vector<1x32x128xf32>
    %87 = vector.shape_cast %86 : vector<1x32x128xf32> to vector<32x128xf32>
    %88 = vector.shape_cast %85 : vector<32x128xf32> to vector<1x32x128xf32>
    tpu.vector_store %arg4[%c0_32, %c0_33, %c0_34], %88 {strides = array<i32>} : memref<1x32x128xf32, #tpu.memory_space<vmem>>, vector<1x32x128xf32>,
    return
  }
  func.func @transform_0(%arg0: i32) -> (i32, i32, i32) {
    %c0_i32 = arith.constant 0 : i32
    %c0_i32_0 = arith.constant 0 : i32
    %c0_i32_1 = arith.constant 0 : i32
    return %arg0, %c0_i32, %c0_i32_0 : i32, i32, i32
  }
  func.func @transform_1(%arg0: i32) -> (i32, i32, i32) {
    %c0_i32 = arith.constant 0 : i32
    %c0_i32_0 = arith.constant 0 : i32
    %c0_i32_1 = arith.constant 0 : i32
    %c0_i32_2 = arith.constant 0 : i32
    return %c0_i32, %c0_i32_0, %c0_i32_1 : i32, i32, i32
  }
  func.func @transform_2(%arg0: i32) -> (i32, i32) {
    %c0_i32 = arith.constant 0 : i32
    %c0_i32_0 = arith.constant 0 : i32
    %c0_i32_1 = arith.constant 0 : i32
    return %c0_i32, %c0_i32_0 : i32, i32
  }
  func.func @transform_3(%arg0: i32) -> (i32, i32, i32) {
    %c0_i32 = arith.constant 0 : i32
    %c0_i32_0 = arith.constant 0 : i32
    %c0_i32_1 = arith.constant 0 : i32
    return %arg0, %c0_i32, %c0_i32_0 : i32, i32, i32
  }
}

</mosaic_0001>

<llo_original>
// kernel: tile.8
$region0: #{tile.8}
  #allocation0 [shape = 's32[1]{0}', space=sflag, size = 0x4, scoped, tag = 'scoped memory for tile.8']
  %s0 = inlined_call_operand.vmem [shape: f32[64], index: 0, kind: input, shape index: {}]
  %s1 = inlined_call_operand.vmem [shape: f32[4,64], index: 1, kind: output, shape index: {}]
  // Predicated region
  $region2: #{tile.8} parent=0 // pred_check
    _
  $region3: #{tile.8} parent=0 // pred_check_branch
    %3 = sbr.rel (0) target = $region5
  $region4: #{tile.8} parent=0 // pred_region
    _
  $region5: #{tile.8} parent=0 // pred_fallthru
    _
  %v4 = vld [vmem:[%s0] ss:$0 sm:$0xff]
  %5 = vst [vmem:[%s1] sm:$0xf] %v4

// kernel: tile.9
$region0: #{tile.9}
  %s0 = inlined_call_operand.vmem [shape: f32[4,64], index: 0, kind: input, shape index: {}]
  %s1 = inlined_call_operand.vmem [shape: f32[1,256], index: 1, kind: output, shape index: {}]
  $region1: #{tile.9} parent=0
    #allocation0 [shape = 'u8[8192]{0}', space=vmem, size = 0x2000, scoped, tag = 'scoped mem for output reshape']
    #allocation1 [shape = 'u8[4096]{0}', space=vmem, size = 0x1000, scoped, tag = 'scoped mem for input reshape']
    %s3 = ssub.s32 16, 1
    %v4 = vld [vmem:[%s0] sm:%s3]
    %5 = vst [vmem:[#allocation1] sm:%s3] %v4
    %s6 = smov 3
    %v7 = vld [vmem:[#allocation1] ss:$2 sm:%s6]
    %vm8 = vcmask 523264
    %9 = vst.msk [vmem:[#allocation0] ss:$8 sm:$0x3] %vm8, %v7
    %s10 = scalar_lea.vmem [#allocation1], 1
    %s11 = smov 3
    %v12 = vld [vmem:[%s10] ss:$2 sm:%s11]
    %13 = vrot.lane.b32.xlu0 %v12, 64
    %v14 = vpop.permute.xlu0 %13
    %vm15 = vcmask 1048064
    %16 = vst.msk [vmem:[#allocation0] ss:$8 sm:$0x3] %vm15, %v14
    %s18 = ssub.s32 2, 1
    %v19 = vld [vmem:[#allocation0] sm:%s18]
    %s21 = ssub.s32 2, 1
    %22 = vst [vmem:[%s1] sm:%s21] %v19
    %s23 = scalar_lea.vmem [#allocation0], 8
    %v24 = vld [vmem:[%s23] sm:%s18]
    %s26 = ssub.s32 2, 1
    %s27 = scalar_lea.vmem %s1, 1
    %28 = vst [vmem:[%s27] sm:%s26] %v24

// kernel: thermal_module_forward.1
$region0: #{thermal_module_forward.1}
  #allocation0 [shape = 'u32[]', space=smem, size = 0x4, offset = 0x4, fixed_abs, tag = 'smem constant byte address 0x4 - core index']
  #allocation1 [shape = 'u32[72,128]{1,0:T(1,128)}', space=vmem, size = 0x9000, scoped, tag = 'internal scratch']
  %s0 = inlined_call_operand.vmem [shape: bf16[2,76,192], index: 0, kind: input, shape index: {}]
  %s1 = inlined_call_operand.vmem [shape: bf16[4,192,256], index: 1, kind: input, shape index: {}]
  %s2 = inlined_call_operand.vmem [shape: f32[1,256], index: 2, kind: input, shape index: {}]
  %s3 = inlined_call_operand.vmem [shape: f32[2,32,128], index: 3, kind: output, shape index: {}]
  %s4 = sld [smem:[#allocation0]]
  $region45: #{thermal_module_forward.1} parent=0
    _
  %s6 = ssub.s32 1, %s4
  %s7 = scalar_select 0, %s6, %s4
  loop: start=0, step=1, limit=4
  $region2: #{thermal_module_forward.1} parent=0 // loop_pre_header
    _
  $region3: #{thermal_module_forward.1} parent=0 // loop_header
    %s9 = sphi 0, %s13
    %p10 = scmp.ge.s32.totalorder %s9, 4
    %s19 = sphi 0, %s21
    %s22 = sphi 0, %s19
    %s23 = sphi 0, %s22
    %s39 = sphi 0, %s23
    %s43 = sphi 0, %s43
    %s45 = sphi 0, %s43
    %s46 = sphi 0, %s45
    %s60 = sphi 0, %s46
    %s64 = sphi 0, %s64
    %s66 = sphi 0, %s64
    %s67 = sphi 0, %s66
    %s81 = sphi 0, %s67
    %s87 = sphi 0, %s89
    %s90 = sphi 0, %s87
    %s91 = sphi 0, %s90
    %s107 = sphi 0, %s91
  $region4: #{thermal_module_forward.1} parent=0 // loop_header_branch
    %12 = sbr.rel (%p10) target = $region8
  $region5: #{thermal_module_forward.1} parent=0 // loop_body
    %s14 = ssub.s32 %s9, 1
    %s15 = ssub.s32 %s9, 2
    %s16 = sadd.s32 %s9, 1
    %s17 = ssub.s32 %s9, %s16
    %p18 = scmp.eq.s32.totalorder %s17, 0
    %s20 = sadd.s32 %s19, 1
    %s21 = scalar_select %p18, %s19, %s20
    %p24 = pneg %p18
    %p25 = scmp.eq.s32.totalorder %s9, 1
    %p26 = por %p24, %p25
    %p27 = scmp.ne.s32.totalorder %s19, %s22
    %p28 = scmp.eq.s32.totalorder %s9, 0
    %p29 = por %p27, %p28
    %p30 = scmp.ne.s32.totalorder %s19, %s22
    %p31 = scmp.eq.s32.totalorder %s14, 1
    %p32 = por %p30, %p31
    %p33 = scmp.ne.s32.totalorder %s22, %s23
    %p34 = scmp.eq.s32.totalorder %s14, 0
    %p35 = por %p33, %p34
    %p36 = scmp.ne.s32.totalorder %s22, %s23
    %p37 = scmp.eq.s32.totalorder %s15, 1
    %p38 = por %p36, %p37
    %p40 = scmp.ne.s32.totalorder %s23, %s39
    %p41 = scmp.eq.s32.totalorder %s15, 0
    %p42 = por %p40, %p41
    %s44 = sadd.s32 %s43, 1
    %p47 = scmp.eq.s32.totalorder %s9, 1
    %p48 = scmp.ne.s32.totalorder %s43, %s45
    %p49 = scmp.eq.s32.totalorder %s9, 0
    %p50 = por %p48, %p49
    %p51 = scmp.ne.s32.totalorder %s43, %s45
    %p52 = scmp.eq.s32.totalorder %s14, 1
    %p53 = por %p51, %p52
    %p54 = scmp.ne.s32.totalorder %s45, %s46
    %p55 = scmp.eq.s32.totalorder %s14, 0
    %p56 = por %p54, %p55
    %p57 = scmp.ne.s32.totalorder %s45, %s46
    %p58 = scmp.eq.s32.totalorder %s15, 1
    %p59 = por %p57, %p58
    %p61 = scmp.ne.s32.totalorder %s46, %s60
    %p62 = scmp.eq.s32.totalorder %s15, 0
    %p63 = por %p61, %p62
    %s65 = sadd.s32 %s64, 1
    %p68 = scmp.eq.s32.totalorder %s9, 1
    %p69 = scmp.ne.s32.totalorder %s64, %s66
    %p70 = scmp.eq.s32.totalorder %s9, 0
    %p71 = por %p69, %p70
    %p72 = scmp.ne.s32.totalorder %s64, %s66
    %p73 = scmp.eq.s32.totalorder %s14, 1
    %p74 = por %p72, %p73
    %p75 = scmp.ne.s32.totalorder %s66, %s67
    %p76 = scmp.eq.s32.totalorder %s14, 0
    %p77 = por %p75, %p76
    %p78 = scmp.ne.s32.totalorder %s66, %s67
    %p79 = scmp.eq.s32.totalorder %s15, 1
    %p80 = por %p78, %p79
    %p82 = scmp.ne.s32.totalorder %s67, %s81
    %p83 = scmp.eq.s32.totalorder %s15, 0
    %p84 = por %p82, %p83
    %s85 = ssub.s32 %s9, %s16
    %p86 = scmp.eq.s32.totalorder %s85, 0
    %s88 = sadd.s32 %s87, 1
    %s89 = scalar_select %p86, %s87, %s88
    %p92 = pneg %p86
    %p93 = scmp.eq.s32.totalorder %s9, 1
    %p94 = por %p92, %p93
    %p95 = scmp.ne.s32.totalorder %s87, %s90
    %p96 = scmp.eq.s32.totalorder %s9, 0
    %p97 = por %p95, %p96
    %p98 = scmp.ne.s32.totalorder %s87, %s90
    %p99 = scmp.eq.s32.totalorder %s14, 1
    %p100 = por %p98, %p99
    %p101 = scmp.ne.s32.totalorder %s90, %s91
    %p102 = scmp.eq.s32.totalorder %s14, 0
    %p103 = por %p101, %p102
    %p104 = scmp.ne.s32.totalorder %s90, %s91
    %p105 = scmp.eq.s32.totalorder %s15, 1
    %p106 = por %p104, %p105
    %p108 = scmp.ne.s32.totalorder %s91, %s107
    %p109 = scmp.eq.s32.totalorder %s15, 0
    %p110 = por %p108, %p109
    %p111 = scmp.le.s32.totalorder 1, %s9
    %p112 = scmp.lt.s32.totalorder %s9, 3
    %p113 = pnand %p111, %p112
    %p114 = pneg %p113
    // Predicated region
    $region9: #{thermal_module_forward.1} parent=5 // pred_check
      _
    $region10: #{thermal_module_forward.1} parent=5 // pred_check_branch
      %116 = sbr.rel (%p113) target = $region12
    $region11: #{thermal_module_forward.1} parent=5 // pred_region
      %s117 = ssub.s32 %s9, 1
      // Predicated region
      $region13: #{thermal_module_forward.1} parent=11 // pred_check
        %p118 = pneg %p56
      $region14: #{thermal_module_forward.1} parent=11 // pred_check_branch
        %120 = sbr.rel (%p118) target = $region16
      $region15: #{thermal_module_forward.1} parent=11 // pred_region
        _
      $region16: #{thermal_module_forward.1} parent=11 // pred_fallthru
        _
      // Predicated region
      $region17: #{thermal_module_forward.1} parent=11 // pred_check
        %p121 = pneg %p77
      $region18: #{thermal_module_forward.1} parent=11 // pred_check_branch
        %123 = sbr.rel (%p121) target = $region20
      $region19: #{thermal_module_forward.1} parent=11 // pred_region
        _
      $region20: #{thermal_module_forward.1} parent=11 // pred_fallthru
        _
    $region12: #{thermal_module_forward.1} parent=5 // pred_fallthru
      _
    %p124 = scmp.lt.s32.totalorder %s9, 2
    // Predicated region
    $region21: #{thermal_module_forward.1} parent=5 // pred_check
      %p125 = pneg %p124
    $region22: #{thermal_module_forward.1} parent=5 // pred_check_branch
      %127 = sbr.rel (%p125) target = $region24
    $region23: #{thermal_module_forward.1} parent=5 // pred_region
      // Predicated region
      $region25: #{thermal_module_forward.1} parent=23 // pred_check
        %p128 = pneg %p29
      $region26: #{thermal_module_forward.1} parent=23 // pred_check_branch
        %130 = sbr.rel (%p128) target = $region28
      $region27: #{thermal_module_forward.1} parent=23 // pred_region
        %p131 = scmp.lt.s32.totalorder %s9, 1
        %s132 = scalar_select %p131, %s9, 1
        %s133 = smul.addr %s132, 20
        %s134 = smul.addr %s133, 4
        %s135 = scalar_lea.vmem %s0, %s134
      $region28: #{thermal_module_forward.1} parent=23 // pred_fallthru
        _
    $region24: #{thermal_module_forward.1} parent=5 // pred_fallthru
      _
    %p136 = scmp.le.s32.totalorder 1, %s9
    %p137 = scmp.lt.s32.totalorder %s9, 3
    %p138 = pnand %p136, %p137
    %p139 = pneg %p138
    // Predicated region
    $region29: #{thermal_module_forward.1} parent=5 // pred_check
      _
    $region30: #{thermal_module_forward.1} parent=5 // pred_check_branch
      %141 = sbr.rel (%p138) target = $region32
    $region31: #{thermal_module_forward.1} parent=5 // pred_region
      %s142 = ssub.s32 %s9, 1
      %p143 = scmp.lt.s32.totalorder %s14, 1
      %s144 = scalar_select %p143, %s14, 1
      %s145 = smul.addr %s144, 20
      %s146 = smul.addr %s145, 4
      %s147 = scalar_lea.vmem %s0, %s146
      %p148 = pneg %p35
      %p149 = pneg %p32
      %p150 = pneg %p56
      %p151 = pneg %p53
      %p152 = pneg %p77
      %p153 = pneg %p74
      %p154 = pneg %p103
      %p155 = pneg %p100
      %p156 = scmp.lt.s32.totalorder %s14, 1
      %s157 = scalar_select %p156, %s14, 1
      %s158 = smul.addr %s157, 4
      %s159 = smul.addr %s158, 8
      %s160 = scalar_lea.vmem %s3, %s159
      %p161 = scmp.lt.s32.totalorder %s14, 1
      %s162 = scalar_select %p161, %s14, 1
      %s163 = smul.addr %s162, 20
      %s164 = smul.addr %s163, 4
      %s165 = scalar_lea.vmem %s0, %s164
      %p166 = scmp.lt.s32.totalorder %s14, 1
      %s167 = scalar_select %p166, %s14, 1
      %s168 = smul.addr %s167, 4
      %s169 = smul.addr %s168, 8
      %s170 = scalar_lea.vmem %s3, %s169
      %v172 = vld [vmem:[%s165] sm:$0xff]
      %v173 = vld [vmem:[%s165 + $0x8] sm:$0xff]
      %v174 = vld [vmem:[%s165 + $0x10] sm:$0xff]
      %v175 = vld [vmem:[%s165 + $0x18] sm:$0xff]
      %v176 = vld [vmem:[%s165 + $0x20] sm:$0xff]
      %v177 = vld [vmem:[%s165 + $0x28] sm:$0xff]
      %v178 = vld [vmem:[%s165 + $0x30] sm:$0xff]
      %v179 = vld [vmem:[%s165 + $0x38] sm:$0xff]
      %v180 = vld [vmem:[%s1] sm:$0xff]
      %v181 = vld [vmem:[%s1 + $0x8] sm:$0xff]
      %v182 = vld [vmem:[%s1 + $0x10] sm:$0xff]
      %v183 = vld [vmem:[%s1 + $0x18] sm:$0xff]
      %v184 = vld [vmem:[%s1 + $0x20] sm:$0xff]
      %v185 = vld [vmem:[%s1 + $0x28] sm:$0xff]
      %v186 = vld [vmem:[%s1 + $0x30] sm:$0xff]
      %v187 = vld [vmem:[%s1 + $0x38] sm:$0xff]
      %v188 = vld [vmem:[%s1 + $0x40] sm:$0xff]
      %v189 = vld [vmem:[%s1 + $0x48] sm:$0xff]
      %v190 = vld [vmem:[%s1 + $0x50] sm:$0xff]
      %v191 = vld [vmem:[%s1 + $0x58] sm:$0xff]
      %v192 = vld [vmem:[%s1 + $0x60] sm:$0xff]
      %v193 = vld [vmem:[%s1 + $0x68] sm:$0xff]
      %v194 = vld [vmem:[%s1 + $0x70] sm:$0xff]
      %v195 = vld [vmem:[%s1 + $0x78] sm:$0xff]
      %v196 = vld [vmem:[%s1 + $0x80] sm:$0xff]
      %v197 = vld [vmem:[%s1 + $0x88] sm:$0xff]
      %v198 = vld [vmem:[%s1 + $0x90] sm:$0xff]
      %v199 = vld [vmem:[%s1 + $0x98] sm:$0xff]
      %v200 = vld [vmem:[%s1 + $0xa0] sm:$0xff]
      %v201 = vld [vmem:[%s1 + $0xa8] sm:$0xff]
      %v202 = vld [vmem:[%s1 + $0xb0] sm:$0xff]
      %v203 = vld [vmem:[%s1 + $0xb8] sm:$0xff]
      %v204 = vld [vmem:[%s165] sm:$0xcc]
      %v205 = vld [vmem:[%s165 + $0x40] sm:$0x33]
      %s206 = scalar_lea.vmem %s1, 192
      %v207 = vld [vmem:[%s206] sm:$0xff]
      %v208 = vld [vmem:[%s206 + $0x8] sm:$0xff]
      %v209 = vld [vmem:[%s206 + $0x10] sm:$0xff]
      %v210 = vld [vmem:[%s206 + $0x18] sm:$0xff]
      %v211 = vld [vmem:[%s206 + $0x20] sm:$0xff]
      %v212 = vld [vmem:[%s206 + $0x28] sm:$0xff]
      %v213 = vld [vmem:[%s206 + $0x30] sm:$0xff]
      %v214 = vld [vmem:[%s206 + $0x38] sm:$0xff]
      %v215 = vld [vmem:[%s206 + $0x40] sm:$0xff]
      %v216 = vld [vmem:[%s206 + $0x48] sm:$0xff]
      %v217 = vld [vmem:[%s206 + $0x50] sm:$0xff]
      %v218 = vld [vmem:[%s206 + $0x58] sm:$0xff]
      %v219 = vld [vmem:[%s206 + $0x60] sm:$0xff]
      %v220 = vld [vmem:[%s206 + $0x68] sm:$0xff]
      %v221 = vld [vmem:[%s206 + $0x70] sm:$0xff]
      %v222 = vld [vmem:[%s206 + $0x78] sm:$0xff]
      %v223 = vld [vmem:[%s206 + $0x80] sm:$0xff]
      %v224 = vld [vmem:[%s206 + $0x88] sm:$0xff]
      %v225 = vld [vmem:[%s206 + $0x90] sm:$0xff]
      %v226 = vld [vmem:[%s206 + $0x98] sm:$0xff]
      %v227 = vld [vmem:[%s206 + $0xa0] sm:$0xff]
      %v228 = vld [vmem:[%s206 + $0xa8] sm:$0xff]
      %v229 = vld [vmem:[%s206 + $0xb0] sm:$0xff]
      %v230 = vld [vmem:[%s206 + $0xb8] sm:$0xff]
      %v240 = vunpack.c.l.b16 %v204
      %v241 = vunpack.c.h.b16 %v204
      %v242 = vunpack.c.l.b16 %v173
      %v243 = vunpack.c.h.b16 %v173
      %v244 = vunpack.c.l.b16 %v174
      %v245 = vunpack.c.h.b16 %v174
      %v246 = vunpack.c.l.b16 %v175
      %v247 = vunpack.c.h.b16 %v175
      %v248 = vunpack.c.l.b16 %v176
      %v249 = vunpack.c.h.b16 %v176
      %v250 = vunpack.c.l.b16 %v177
      %v251 = vunpack.c.h.b16 %v177
      %v252 = vunpack.c.l.b16 %v178
      %v253 = vunpack.c.h.b16 %v178
      %v254 = vunpack.c.l.b16 %v179
      %v255 = vunpack.c.h.b16 %v179
      %v256 = vunpack.c.l.b16 %v205
      %v257 = vunpack.c.h.b16 %v205
      %v258 = vpack.c.b16 %v242, %v240
      %v259 = vpack.c.b16 %v243, %v241
      %v260 = vpack.c.b16 %v246, %v244
      %v261 = vpack.c.b16 %v247, %v245
      %v262 = vpack.c.b16 %v250, %v248
      %v263 = vpack.c.b16 %v251, %v249
      %v264 = vpack.c.b16 %v254, %v252
      %v265 = vpack.c.b16 %v255, %v253
      %v266 = vpack.c.b16 %v256, %v256
      %v267 = vpack.c.b16 %v257, %v257
      %vm268 = vcmask 1045504
      %v269 = vrot.slane %v258, 2
      %v270 = vrot.slane %v260, 2
      %v271 = vsel %vm268, %v269, %v270
      %v272 = vrot.slane %v259, 2
      %v273 = vrot.slane %v261, 2
      %v274 = vsel %vm268, %v272, %v273
      %v275 = vrot.slane %v262, 2
      %v276 = vsel %vm268, %v270, %v275
      %v277 = vrot.slane %v263, 2
      %v278 = vsel %vm268, %v273, %v277
      %v279 = vrot.slane %v264, 2
      %v280 = vsel %vm268, %v275, %v279
      %v281 = vrot.slane %v265, 2
      %v282 = vsel %vm268, %v277, %v281
      %v283 = vrot.slane %v266, 2
      %v284 = vsel %vm268, %v279, %v283
      %v285 = vrot.slane %v267, 2
      %v286 = vsel %vm268, %v281, %v285
      %v315 = vunpack.c.l.b16 %v207
      %v316 = vunpack.c.h.b16 %v207
      %v317 = vunpack.c.l.b16 %v208
      %v318 = vunpack.c.h.b16 %v208
      %v319 = vunpack.c.l.b16 %v209
      %v320 = vunpack.c.h.b16 %v209
      %v321 = vunpack.c.l.b16 %v210
      %v322 = vunpack.c.h.b16 %v210
      %v323 = vunpack.c.l.b16 %v211
      %v324 = vunpack.c.h.b16 %v211
      %v325 = vunpack.c.l.b16 %v212
      %v326 = vunpack.c.h.b16 %v212
      %v327 = vunpack.c.l.b16 %v213
      %v328 = vunpack.c.h.b16 %v213
      %v329 = vunpack.c.l.b16 %v214
      %v330 = vunpack.c.h.b16 %v214
      %v331 = vunpack.c.l.b16 %v215
      %v332 = vunpack.c.h.b16 %v215
      %v333 = vunpack.c.l.b16 %v216
      %v334 = vunpack.c.h.b16 %v216
      %v335 = vunpack.c.l.b16 %v217
      %v336 = vunpack.c.h.b16 %v217
      %v337 = vunpack.c.l.b16 %v218
      %v338 = vunpack.c.h.b16 %v218
      %v339 = vunpack.c.l.b16 %v219
      %v340 = vunpack.c.h.b16 %v219
      %v341 = vunpack.c.l.b16 %v220
      %v342 = vunpack.c.h.b16 %v220
      %v343 = vunpack.c.l.b16 %v221
      %v344 = vunpack.c.h.b16 %v221
      %v345 = vunpack.c.l.b16 %v222
      %v346 = vunpack.c.h.b16 %v222
      %v347 = vunpack.c.l.b16 %v223
      %v348 = vunpack.c.h.b16 %v223
      %v349 = vunpack.c.l.b16 %v224
      %v350 = vunpack.c.h.b16 %v224
      %v351 = vunpack.c.l.b16 %v225
      %v352 = vunpack.c.h.b16 %v225
      %v353 = vunpack.c.l.b16 %v226
      %v354 = vunpack.c.h.b16 %v226
      %v355 = vunpack.c.l.b16 %v227
      %v356 = vunpack.c.h.b16 %v227
      %v357 = vunpack.c.l.b16 %v228
      %v358 = vunpack.c.h.b16 %v228
      %v359 = vunpack.c.l.b16 %v229
      %v360 = vunpack.c.h.b16 %v229
      %v361 = vunpack.c.l.b16 %v230
      %v362 = vunpack.c.h.b16 %v230
      %v363 = vpack.c.b16 %v317, %v315
      %v364 = vpack.c.b16 %v318, %v316
      %v365 = vpack.c.b16 %v321, %v319
      %v366 = vpack.c.b16 %v322, %v320
      %v367 = vpack.c.b16 %v325, %v323
      %v368 = vpack.c.b16 %v326, %v324
      %v369 = vpack.c.b16 %v329, %v327
      %v370 = vpack.c.b16 %v330, %v328
      %v371 = vpack.c.b16 %v333, %v331
      %v372 = vpack.c.b16 %v334, %v332
      %v373 = vpack.c.b16 %v337, %v335
      %v374 = vpack.c.b16 %v338, %v336
      %v375 = vpack.c.b16 %v341, %v339
      %v376 = vpack.c.b16 %v342, %v340
      %v377 = vpack.c.b16 %v345, %v343
      %v378 = vpack.c.b16 %v346, %v344
      %v379 = vpack.c.b16 %v349, %v347
      %v380 = vpack.c.b16 %v350, %v348
      %v381 = vpack.c.b16 %v353, %v351
      %v382 = vpack.c.b16 %v354, %v352
      %v383 = vpack.c.b16 %v357, %v355
      %v384 = vpack.c.b16 %v358, %v356
      %v385 = vpack.c.b16 %v361, %v359
      %v386 = vpack.c.b16 %v362, %v360
      %vm411 = vcmask 523264
      %v413 = vsel %vm411, %v274, 0
      %v416 = vsel %vm411, %v278, 0
      %v419 = vsel %vm411, %v282, 0
      %v422 = vsel %vm411, %v286, 0
      %424 = vmatpush.bf16.msra.mxu0 %v377
      %425 = vmatpush.bf16.msra.mxu0 %v375
      %426 = vmatpush.bf16.msra.mxu0 %v373
      %427 = vmatpush.bf16.msra.mxu0 %v371
      %428 = vmatpush.bf16.msra.mxu0 %v369
      %429 = vmatpush.bf16.msra.mxu0 %v367
      %430 = vmatpush.bf16.msra.mxu0 %v365
      %431 = vmatpush.bf16.msra.mxu0 %v363
      %432 = vmatmul.bf16.gmra.mxu0 %v271
      %v433 = vpop.f32.mrf.mxu0
      %v434 = vadd.f32 0.0, %v433
      %v435 = vpop.f32.mrf.mxu0
      %v436 = vadd.f32 0.0, %v435
      %437 = vmatmul.bf16.gmra.mxu0 %v276
      %v438 = vpop.f32.mrf.mxu0
      %v439 = vadd.f32 0.0, %v438
      %v440 = vpop.f32.mrf.mxu0
      %v441 = vadd.f32 0.0, %v440
      %442 = vmatmul.bf16.gmra.mxu0 %v280
      %v443 = vpop.f32.mrf.mxu0
      %v444 = vadd.f32 0.0, %v443
      %v445 = vpop.f32.mrf.mxu0
      %v446 = vadd.f32 0.0, %v445
      %447 = vmatmul.bf16.gmra.mxu0 %v284
      %v448 = vpop.f32.mrf.mxu0
      %v449 = vadd.f32 0.0, %v448
      %v450 = vpop.f32.mrf.mxu0
      %v451 = vadd.f32 0.0, %v450
      %452 = vdwg.mxu0
      %453 = vmatpush.bf16.msra.mxu0 0
      %454 = vmatpush.bf16.msra.mxu0 0
      %455 = vmatpush.bf16.msra.mxu0 0
      %456 = vmatpush.bf16.msra.mxu0 0
      %457 = vmatpush.bf16.msra.mxu0 %v385
      %458 = vmatpush.bf16.msra.mxu0 %v383
      %459 = vmatpush.bf16.msra.mxu0 %v381
      %460 = vmatpush.bf16.msra.mxu0 %v379
      %461 = vmatmul.bf16.gmra.mxu0 %v413
      %v462 = vpop.f32.mrf.mxu0
      %v463 = vadd.f32 %v434, %v462
      %v464 = vpop.f32.mrf.mxu0
      %v465 = vadd.f32 %v436, %v464
      %466 = vmatmul.bf16.gmra.mxu0 %v416
      %v467 = vpop.f32.mrf.mxu0
      %v468 = vadd.f32 %v439, %v467
      %v469 = vpop.f32.mrf.mxu0
      %v470 = vadd.f32 %v441, %v469
      %471 = vmatmul.bf16.gmra.mxu0 %v419
      %v472 = vpop.f32.mrf.mxu0
      %v473 = vadd.f32 %v444, %v472
      %v474 = vpop.f32.mrf.mxu0
      %v475 = vadd.f32 %v446, %v474
      %476 = vmatmul.bf16.gmra.mxu0 %v422
      %v477 = vpop.f32.mrf.mxu0
      %v478 = vadd.f32 %v449, %v477
      %v479 = vpop.f32.mrf.mxu0
      %v480 = vadd.f32 %v451, %v479
      %481 = vdwg.mxu0
      %482 = vmatpush.bf16.msra.mxu0 %v378
      %483 = vmatpush.bf16.msra.mxu0 %v376
      %484 = vmatpush.bf16.msra.mxu0 %v374
      %485 = vmatpush.bf16.msra.mxu0 %v372
      %486 = vmatpush.bf16.msra.mxu0 %v370
      %487 = vmatpush.bf16.msra.mxu0 %v368
      %488 = vmatpush.bf16.msra.mxu0 %v366
      %489 = vmatpush.bf16.msra.mxu0 %v364
      %490 = vmatmul.bf16.gmra.mxu0 %v271
      %v491 = vpop.f32.mrf.mxu0
      %v492 = vadd.f32 0.0, %v491
      %v493 = vpop.f32.mrf.mxu0
      %v494 = vadd.f32 0.0, %v493
      %495 = vmatmul.bf16.gmra.mxu0 %v276
      %v496 = vpop.f32.mrf.mxu0
      %v497 = vadd.f32 0.0, %v496
      %v498 = vpop.f32.mrf.mxu0
      %v499 = vadd.f32 0.0, %v498
      %500 = vmatmul.bf16.gmra.mxu0 %v280
      %v501 = vpop.f32.mrf.mxu0
      %v502 = vadd.f32 0.0, %v501
      %v503 = vpop.f32.mrf.mxu0
      %v504 = vadd.f32 0.0, %v503
      %505 = vmatmul.bf16.gmra.mxu0 %v284
      %v506 = vpop.f32.mrf.mxu0
      %v507 = vadd.f32 0.0, %v506
      %v508 = vpop.f32.mrf.mxu0
      %v509 = vadd.f32 0.0, %v508
      %510 = vdwg.mxu0
      %511 = vmatpush.bf16.msra.mxu0 0
      %512 = vmatpush.bf16.msra.mxu0 0
      %513 = vmatpush.bf16.msra.mxu0 0
      %514 = vmatpush.bf16.msra.mxu0 0
      %515 = vmatpush.bf16.msra.mxu0 %v386
      %516 = vmatpush.bf16.msra.mxu0 %v384
      %517 = vmatpush.bf16.msra.mxu0 %v382
      %518 = vmatpush.bf16.msra.mxu0 %v380
      %519 = vmatmul.bf16.gmra.mxu0 %v413
      %v520 = vpop.f32.mrf.mxu0
      %v521 = vadd.f32 %v492, %v520
      %v522 = vpop.f32.mrf.mxu0
      %v523 = vadd.f32 %v494, %v522
      %524 = vmatmul.bf16.gmra.mxu0 %v416
      %v525 = vpop.f32.mrf.mxu0
      %v526 = vadd.f32 %v497, %v525
      %v527 = vpop.f32.mrf.mxu0
      %v528 = vadd.f32 %v499, %v527
      %529 = vmatmul.bf16.gmra.mxu0 %v419
      %v530 = vpop.f32.mrf.mxu0
      %v531 = vadd.f32 %v502, %v530
      %v532 = vpop.f32.mrf.mxu0
      %v533 = vadd.f32 %v504, %v532
      %534 = vmatmul.bf16.gmra.mxu0 %v422
      %v535 = vpop.f32.mrf.mxu0
      %v536 = vadd.f32 %v507, %v535
      %v537 = vpop.f32.mrf.mxu0
      %v538 = vadd.f32 %v509, %v537
      %539 = vdwg.mxu0
      %v541 = vunpack.c.l.b16 %v172
      %v542 = vunpack.c.h.b16 %v172
      %v543 = vpack.c.b16 %v242, %v541
      %v544 = vpack.c.b16 %v243, %v542
      %v573 = vunpack.c.l.b16 %v180
      %v574 = vunpack.c.h.b16 %v180
      %v575 = vunpack.c.l.b16 %v181
      %v576 = vunpack.c.h.b16 %v181
      %v577 = vunpack.c.l.b16 %v182
      %v578 = vunpack.c.h.b16 %v182
      %v579 = vunpack.c.l.b16 %v183
      %v580 = vunpack.c.h.b16 %v183
      %v581 = vunpack.c.l.b16 %v184
      %v582 = vunpack.c.h.b16 %v184
      %v583 = vunpack.c.l.b16 %v185
      %v584 = vunpack.c.h.b16 %v185
      %v585 = vunpack.c.l.b16 %v186
      %v586 = vunpack.c.h.b16 %v186
      %v587 = vunpack.c.l.b16 %v187
      %v588 = vunpack.c.h.b16 %v187
      %v589 = vunpack.c.l.b16 %v188
      %v590 = vunpack.c.h.b16 %v188
      %v591 = vunpack.c.l.b16 %v189
      %v592 = vunpack.c.h.b16 %v189
      %v593 = vunpack.c.l.b16 %v190
      %v594 = vunpack.c.h.b16 %v190
      %v595 = vunpack.c.l.b16 %v191
      %v596 = vunpack.c.h.b16 %v191
      %v597 = vunpack.c.l.b16 %v192
      %v598 = vunpack.c.h.b16 %v192
      %v599 = vunpack.c.l.b16 %v193
      %v600 = vunpack.c.h.b16 %v193
      %v601 = vunpack.c.l.b16 %v194
      %v602 = vunpack.c.h.b16 %v194
      %v603 = vunpack.c.l.b16 %v195
      %v604 = vunpack.c.h.b16 %v195
      %v605 = vunpack.c.l.b16 %v196
      %v606 = vunpack.c.h.b16 %v196
      %v607 = vunpack.c.l.b16 %v197
      %v608 = vunpack.c.h.b16 %v197
      %v609 = vunpack.c.l.b16 %v198
      %v610 = vunpack.c.h.b16 %v198
      %v611 = vunpack.c.l.b16 %v199
      %v612 = vunpack.c.h.b16 %v199
      %v613 = vunpack.c.l.b16 %v200
      %v614 = vunpack.c.h.b16 %v200
      %v615 = vunpack.c.l.b16 %v201
      %v616 = vunpack.c.h.b16 %v201
      %v617 = vunpack.c.l.b16 %v202
      %v618 = vunpack.c.h.b16 %v202
      %v619 = vunpack.c.l.b16 %v203
      %v620 = vunpack.c.h.b16 %v203
      %v621 = vpack.c.b16 %v575, %v573
      %v622 = vpack.c.b16 %v576, %v574
      %v623 = vpack.c.b16 %v579, %v577
      %v624 = vpack.c.b16 %v580, %v578
      %v625 = vpack.c.b16 %v583, %v581
      %v626 = vpack.c.b16 %v584, %v582
      %v627 = vpack.c.b16 %v587, %v585
      %v628 = vpack.c.b16 %v588, %v586
      %v629 = vpack.c.b16 %v591, %v589
      %v630 = vpack.c.b16 %v592, %v590
      %v631 = vpack.c.b16 %v595, %v593
      %v632 = vpack.c.b16 %v596, %v594
      %v633 = vpack.c.b16 %v599, %v597
      %v634 = vpack.c.b16 %v600, %v598
      %v635 = vpack.c.b16 %v603, %v601
      %v636 = vpack.c.b16 %v604, %v602
      %v637 = vpack.c.b16 %v607, %v605
      %v638 = vpack.c.b16 %v608, %v606
      %v639 = vpack.c.b16 %v611, %v609
      %v640 = vpack.c.b16 %v612, %v610
      %v641 = vpack.c.b16 %v615, %v613
      %v642 = vpack.c.b16 %v616, %v614
      %v643 = vpack.c.b16 %v619, %v617
      %v644 = vpack.c.b16 %v620, %v618
      %v670 = vsel %vm411, %v544, 0
      %v673 = vsel %vm411, %v261, 0
      %v676 = vsel %vm411, %v263, 0
      %v679 = vsel %vm411, %v265, 0
      %681 = vmatpush.bf16.msra.mxu0 %v635
      %682 = vmatpush.bf16.msra.mxu0 %v633
      %683 = vmatpush.bf16.msra.mxu0 %v631
      %684 = vmatpush.bf16.msra.mxu0 %v629
      %685 = vmatpush.bf16.msra.mxu0 %v627
      %686 = vmatpush.bf16.msra.mxu0 %v625
      %687 = vmatpush.bf16.msra.mxu0 %v623
      %688 = vmatpush.bf16.msra.mxu0 %v621
      %689 = vmatmul.bf16.gmra.mxu0 %v543
      %v690 = vpop.f32.mrf.mxu0
      %v691 = vadd.f32 %v463, %v690
      %v692 = vpop.f32.mrf.mxu0
      %v693 = vadd.f32 %v465, %v692
      %694 = vmatmul.bf16.gmra.mxu0 %v260
      %v695 = vpop.f32.mrf.mxu0
      %v696 = vadd.f32 %v468, %v695
      %v697 = vpop.f32.mrf.mxu0
      %v698 = vadd.f32 %v470, %v697
      %699 = vmatmul.bf16.gmra.mxu0 %v262
      %v700 = vpop.f32.mrf.mxu0
      %v701 = vadd.f32 %v473, %v700
      %v702 = vpop.f32.mrf.mxu0
      %v703 = vadd.f32 %v475, %v702
      %704 = vmatmul.bf16.gmra.mxu0 %v264
      %v705 = vpop.f32.mrf.mxu0
      %v706 = vadd.f32 %v478, %v705
      %v707 = vpop.f32.mrf.mxu0
      %v708 = vadd.f32 %v480, %v707
      %709 = vdwg.mxu0
      %710 = vmatpush.bf16.msra.mxu0 0
      %711 = vmatpush.bf16.msra.mxu0 0
      %712 = vmatpush.bf16.msra.mxu0 0
      %713 = vmatpush.bf16.msra.mxu0 0
      %714 = vmatpush.bf16.msra.mxu0 %v643
      %715 = vmatpush.bf16.msra.mxu0 %v641
      %716 = vmatpush.bf16.msra.mxu0 %v639
      %717 = vmatpush.bf16.msra.mxu0 %v637
      %718 = vmatmul.bf16.gmra.mxu0 %v670
      %v719 = vpop.f32.mrf.mxu0
      %v720 = vadd.f32 %v691, %v719
      %v721 = vpop.f32.mrf.mxu0
      %v722 = vadd.f32 %v693, %v721
      %723 = vmatmul.bf16.gmra.mxu0 %v673
      %v724 = vpop.f32.mrf.mxu0
      %v725 = vadd.f32 %v696, %v724
      %v726 = vpop.f32.mrf.mxu0
      %v727 = vadd.f32 %v698, %v726
      %728 = vmatmul.bf16.gmra.mxu0 %v676
      %v729 = vpop.f32.mrf.mxu0
      %v730 = vadd.f32 %v701, %v729
      %v731 = vpop.f32.mrf.mxu0
      %v732 = vadd.f32 %v703, %v731
      %733 = vmatmul.bf16.gmra.mxu0 %v679
      %v734 = vpop.f32.mrf.mxu0
      %v735 = vadd.f32 %v706, %v734
      %v736 = vpop.f32.mrf.mxu0
      %v737 = vadd.f32 %v708, %v736
      %738 = vdwg.mxu0
      %739 = vmatpush.bf16.msra.mxu0 %v636
      %740 = vmatpush.bf16.msra.mxu0 %v634
      %741 = vmatpush.bf16.msra.mxu0 %v632
      %742 = vmatpush.bf16.msra.mxu0 %v630
      %743 = vmatpush.bf16.msra.mxu0 %v628
      %744 = vmatpush.bf16.msra.mxu0 %v626
      %745 = vmatpush.bf16.msra.mxu0 %v624
      %746 = vmatpush.bf16.msra.mxu0 %v622
      %747 = vmatmul.bf16.gmra.mxu0 %v543
      %v748 = vpop.f32.mrf.mxu0
      %v749 = vadd.f32 %v521, %v748
      %v750 = vpop.f32.mrf.mxu0
      %v751 = vadd.f32 %v523, %v750
      %752 = vmatmul.bf16.gmra.mxu0 %v260
      %v753 = vpop.f32.mrf.mxu0
      %v754 = vadd.f32 %v526, %v753
      %v755 = vpop.f32.mrf.mxu0
      %v756 = vadd.f32 %v528, %v755
      %757 = vmatmul.bf16.gmra.mxu0 %v262
      %v758 = vpop.f32.mrf.mxu0
      %v759 = vadd.f32 %v531, %v758
      %v760 = vpop.f32.mrf.mxu0
      %v761 = vadd.f32 %v533, %v760
      %762 = vmatmul.bf16.gmra.mxu0 %v264
      %v763 = vpop.f32.mrf.mxu0
      %v764 = vadd.f32 %v536, %v763
      %v765 = vpop.f32.mrf.mxu0
      %v766 = vadd.f32 %v538, %v765
      %767 = vdwg.mxu0
      %768 = vmatpush.bf16.msra.mxu0 0
      %769 = vmatpush.bf16.msra.mxu0 0
      %770 = vmatpush.bf16.msra.mxu0 0
      %771 = vmatpush.bf16.msra.mxu0 0
      %772 = vmatpush.bf16.msra.mxu0 %v644
      %773 = vmatpush.bf16.msra.mxu0 %v642
      %774 = vmatpush.bf16.msra.mxu0 %v640
      %775 = vmatpush.bf16.msra.mxu0 %v638
      %776 = vmatmul.bf16.gmra.mxu0 %v670
      %v777 = vpop.f32.mrf.mxu0
      %v778 = vadd.f32 %v749, %v777
      %v779 = vpop.f32.mrf.mxu0
      %v780 = vadd.f32 %v751, %v779
      %781 = vmatmul.bf16.gmra.mxu0 %v673
      %v782 = vpop.f32.mrf.mxu0
      %v783 = vadd.f32 %v754, %v782
      %v784 = vpop.f32.mrf.mxu0
      %v785 = vadd.f32 %v756, %v784
      %786 = vmatmul.bf16.gmra.mxu0 %v676
      %v787 = vpop.f32.mrf.mxu0
      %v788 = vadd.f32 %v759, %v787
      %v789 = vpop.f32.mrf.mxu0
      %v790 = vadd.f32 %v761, %v789
      %791 = vmatmul.bf16.gmra.mxu0 %v679
      %v792 = vpop.f32.mrf.mxu0
      %v793 = vadd.f32 %v764, %v792
      %v794 = vpop.f32.mrf.mxu0
      %v795 = vadd.f32 %v766, %v794
      %796 = vdwg.mxu0
      %v797 = vld [vmem:[%s165 + $0x40] sm:$0xff]
      %s798 = scalar_lea.vmem %s1, 384
      %v799 = vld [vmem:[%s798] sm:$0xff]
      %v800 = vld [vmem:[%s798 + $0x8] sm:$0xff]
      %v801 = vld [vmem:[%s798 + $0x10] sm:$0xff]
      %v802 = vld [vmem:[%s798 + $0x18] sm:$0xff]
      %v803 = vld [vmem:[%s798 + $0x20] sm:$0xff]
      %v804 = vld [vmem:[%s798 + $0x28] sm:$0xff]
      %v805 = vld [vmem:[%s798 + $0x30] sm:$0xff]
      %v806 = vld [vmem:[%s798 + $0x38] sm:$0xff]
      %v807 = vld [vmem:[%s798 + $0x40] sm:$0xff]
      %v808 = vld [vmem:[%s798 + $0x48] sm:$0xff]
      %v809 = vld [vmem:[%s798 + $0x50] sm:$0xff]
      %v810 = vld [vmem:[%s798 + $0x58] sm:$0xff]
      %v811 = vld [vmem:[%s798 + $0x60] sm:$0xff]
      %v812 = vld [vmem:[%s798 + $0x68] sm:$0xff]
      %v813 = vld [vmem:[%s798 + $0x70] sm:$0xff]
      %v814 = vld [vmem:[%s798 + $0x78] sm:$0xff]
      %v815 = vld [vmem:[%s798 + $0x80] sm:$0xff]
      %v816 = vld [vmem:[%s798 + $0x88] sm:$0xff]
      %v817 = vld [vmem:[%s798 + $0x90] sm:$0xff]
      %v818 = vld [vmem:[%s798 + $0x98] sm:$0xff]
      %v819 = vld [vmem:[%s798 + $0xa0] sm:$0xff]
      %v820 = vld [vmem:[%s798 + $0xa8] sm:$0xff]
      %v821 = vld [vmem:[%s798 + $0xb0] sm:$0xff]
      %v822 = vld [vmem:[%s798 + $0xb8] sm:$0xff]
      %v824 = vunpack.c.l.b16 %v797
      %v825 = vunpack.c.h.b16 %v797
      %v826 = vpack.c.b16 %v244, %v242
      %v827 = vpack.c.b16 %v245, %v243
      %v828 = vpack.c.b16 %v248, %v246
      %v829 = vpack.c.b16 %v249, %v247
      %v830 = vpack.c.b16 %v252, %v250
      %v831 = vpack.c.b16 %v253, %v251
      %v832 = vpack.c.b16 %v824, %v254
      %v833 = vpack.c.b16 %v825, %v255
      %v862 = vunpack.c.l.b16 %v799
      %v863 = vunpack.c.h.b16 %v799
      %v864 = vunpack.c.l.b16 %v800
      %v865 = vunpack.c.h.b16 %v800
      %v866 = vunpack.c.l.b16 %v801
      %v867 = vunpack.c.h.b16 %v801
      %v868 = vunpack.c.l.b16 %v802
      %v869 = vunpack.c.h.b16 %v802
      %v870 = vunpack.c.l.b16 %v803
      %v871 = vunpack.c.h.b16 %v803
      %v872 = vunpack.c.l.b16 %v804
      %v873 = vunpack.c.h.b16 %v804
      %v874 = vunpack.c.l.b16 %v805
      %v875 = vunpack.c.h.b16 %v805
      %v876 = vunpack.c.l.b16 %v806
      %v877 = vunpack.c.h.b16 %v806
      %v878 = vunpack.c.l.b16 %v807
      %v879 = vunpack.c.h.b16 %v807
      %v880 = vunpack.c.l.b16 %v808
      %v881 = vunpack.c.h.b16 %v808
      %v882 = vunpack.c.l.b16 %v809
      %v883 = vunpack.c.h.b16 %v809
      %v884 = vunpack.c.l.b16 %v810
      %v885 = vunpack.c.h.b16 %v810
      %v886 = vunpack.c.l.b16 %v811
      %v887 = vunpack.c.h.b16 %v811
      %v888 = vunpack.c.l.b16 %v812
      %v889 = vunpack.c.h.b16 %v812
      %v890 = vunpack.c.l.b16 %v813
      %v891 = vunpack.c.h.b16 %v813
      %v892 = vunpack.c.l.b16 %v814
      %v893 = vunpack.c.h.b16 %v814
      %v894 = vunpack.c.l.b16 %v815
      %v895 = vunpack.c.h.b16 %v815
      %v896 = vunpack.c.l.b16 %v816
      %v897 = vunpack.c.h.b16 %v816
      %v898 = vunpack.c.l.b16 %v817
      %v899 = vunpack.c.h.b16 %v817
      %v900 = vunpack.c.l.b16 %v818
      %v901 = vunpack.c.h.b16 %v818
      %v902 = vunpack.c.l.b16 %v819
      %v903 = vunpack.c.h.b16 %v819
      %v904 = vunpack.c.l.b16 %v820
      %v905 = vunpack.c.h.b16 %v820
      %v906 = vunpack.c.l.b16 %v821
      %v907 = vunpack.c.h.b16 %v821
      %v908 = vunpack.c.l.b16 %v822
      %v909 = vunpack.c.h.b16 %v822
      %v910 = vpack.c.b16 %v864, %v862
      %v911 = vpack.c.b16 %v865, %v863
      %v912 = vpack.c.b16 %v868, %v866
      %v913 = vpack.c.b16 %v869, %v867
      %v914 = vpack.c.b16 %v872, %v870
      %v915 = vpack.c.b16 %v873, %v871
      %v916 = vpack.c.b16 %v876, %v874
      %v917 = vpack.c.b16 %v877, %v875
      %v918 = vpack.c.b16 %v880, %v878
      %v919 = vpack.c.b16 %v881, %v879
      %v920 = vpack.c.b16 %v884, %v882
      %v921 = vpack.c.b16 %v885, %v883
      %v922 = vpack.c.b16 %v888, %v886
      %v923 = vpack.c.b16 %v889, %v887
      %v924 = vpack.c.b16 %v892, %v890
      %v925 = vpack.c.b16 %v893, %v891
      %v926 = vpack.c.b16 %v896, %v894
      %v927 = vpack.c.b16 %v897, %v895
      %v928 = vpack.c.b16 %v900, %v898
      %v929 = vpack.c.b16 %v901, %v899
      %v930 = vpack.c.b16 %v904, %v902
      %v931 = vpack.c.b16 %v905, %v903
      %v932 = vpack.c.b16 %v908, %v906
      %v933 = vpack.c.b16 %v909, %v907
      %v959 = vsel %vm411, %v827, 0
      %v962 = vsel %vm411, %v829, 0
      %v965 = vsel %vm411, %v831, 0
      %v968 = vsel %vm411, %v833, 0
      %970 = vmatpush.bf16.msra.mxu0 %v924
      %971 = vmatpush.bf16.msra.mxu0 %v922
      %972 = vmatpush.bf16.msra.mxu0 %v920
      %973 = vmatpush.bf16.msra.mxu0 %v918
      %974 = vmatpush.bf16.msra.mxu0 %v916
      %975 = vmatpush.bf16.msra.mxu0 %v914
      %976 = vmatpush.bf16.msra.mxu0 %v912
      %977 = vmatpush.bf16.msra.mxu0 %v910
      %978 = vmatmul.bf16.gmra.mxu0 %v826
      %v979 = vpop.f32.mrf.mxu0
      %v980 = vadd.f32 0.0, %v979
      %v981 = vpop.f32.mrf.mxu0
      %v982 = vadd.f32 0.0, %v981
      %983 = vmatmul.bf16.gmra.mxu0 %v828
      %v984 = vpop.f32.mrf.mxu0
      %v985 = vadd.f32 0.0, %v984
      %v986 = vpop.f32.mrf.mxu0
      %v987 = vadd.f32 0.0, %v986
      %988 = vmatmul.bf16.gmra.mxu0 %v830
      %v989 = vpop.f32.mrf.mxu0
      %v990 = vadd.f32 0.0, %v989
      %v991 = vpop.f32.mrf.mxu0
      %v992 = vadd.f32 0.0, %v991
      %993 = vmatmul.bf16.gmra.mxu0 %v832
      %v994 = vpop.f32.mrf.mxu0
      %v995 = vadd.f32 0.0, %v994
      %v996 = vpop.f32.mrf.mxu0
      %v997 = vadd.f32 0.0, %v996
      %998 = vdwg.mxu0
      %999 = vmatpush.bf16.msra.mxu0 0
      %1000 = vmatpush.bf16.msra.mxu0 0
      %1001 = vmatpush.bf16.msra.mxu0 0
      %1002 = vmatpush.bf16.msra.mxu0 0
      %1003 = vmatpush.bf16.msra.mxu0 %v932
      %1004 = vmatpush.bf16.msra.mxu0 %v930
      %1005 = vmatpush.bf16.msra.mxu0 %v928
      %1006 = vmatpush.bf16.msra.mxu0 %v926
      %1007 = vmatmul.bf16.gmra.mxu0 %v959
      %v1008 = vpop.f32.mrf.mxu0
      %v1009 = vadd.f32 %v980, %v1008
      %v1010 = vpop.f32.mrf.mxu0
      %v1011 = vadd.f32 %v982, %v1010
      %1012 = vmatmul.bf16.gmra.mxu0 %v962
      %v1013 = vpop.f32.mrf.mxu0
      %v1014 = vadd.f32 %v985, %v1013
      %v1015 = vpop.f32.mrf.mxu0
      %v1016 = vadd.f32 %v987, %v1015
      %1017 = vmatmul.bf16.gmra.mxu0 %v965
      %v1018 = vpop.f32.mrf.mxu0
      %v1019 = vadd.f32 %v990, %v1018
      %v1020 = vpop.f32.mrf.mxu0
      %v1021 = vadd.f32 %v992, %v1020
      %1022 = vmatmul.bf16.gmra.mxu0 %v968
      %v1023 = vpop.f32.mrf.mxu0
      %v1024 = vadd.f32 %v995, %v1023
      %v1025 = vpop.f32.mrf.mxu0
      %v1026 = vadd.f32 %v997, %v1025
      %1027 = vdwg.mxu0
      %1028 = vmatpush.bf16.msra.mxu0 %v925
      %1029 = vmatpush.bf16.msra.mxu0 %v923
      %1030 = vmatpush.bf16.msra.mxu0 %v921
      %1031 = vmatpush.bf16.msra.mxu0 %v919
      %1032 = vmatpush.bf16.msra.mxu0 %v917
      %1033 = vmatpush.bf16.msra.mxu0 %v915
      %1034 = vmatpush.bf16.msra.mxu0 %v913
      %1035 = vmatpush.bf16.msra.mxu0 %v911
      %1036 = vmatmul.bf16.gmra.mxu0 %v826
      %v1037 = vpop.f32.mrf.mxu0
      %v1038 = vadd.f32 0.0, %v1037
      %v1039 = vpop.f32.mrf.mxu0
      %v1040 = vadd.f32 0.0, %v1039
      %1041 = vmatmul.bf16.gmra.mxu0 %v828
      %v1042 = vpop.f32.mrf.mxu0
      %v1043 = vadd.f32 0.0, %v1042
      %v1044 = vpop.f32.mrf.mxu0
      %v1045 = vadd.f32 0.0, %v1044
      %1046 = vmatmul.bf16.gmra.mxu0 %v830
      %v1047 = vpop.f32.mrf.mxu0
      %v1048 = vadd.f32 0.0, %v1047
      %v1049 = vpop.f32.mrf.mxu0
      %v1050 = vadd.f32 0.0, %v1049
      %1051 = vmatmul.bf16.gmra.mxu0 %v832
      %v1052 = vpop.f32.mrf.mxu0
      %v1053 = vadd.f32 0.0, %v1052
      %v1054 = vpop.f32.mrf.mxu0
      %v1055 = vadd.f32 0.0, %v1054
      %1056 = vdwg.mxu0
      %1057 = vmatpush.bf16.msra.mxu0 0
      %1058 = vmatpush.bf16.msra.mxu0 0
      %1059 = vmatpush.bf16.msra.mxu0 0
      %1060 = vmatpush.bf16.msra.mxu0 0
      %1061 = vmatpush.bf16.msra.mxu0 %v933
      %1062 = vmatpush.bf16.msra.mxu0 %v931
      %1063 = vmatpush.bf16.msra.mxu0 %v929
      %1064 = vmatpush.bf16.msra.mxu0 %v927
      %1065 = vmatmul.bf16.gmra.mxu0 %v959
      %v1066 = vpop.f32.mrf.mxu0
      %v1067 = vadd.f32 %v1038, %v1066
      %v1068 = vpop.f32.mrf.mxu0
      %v1069 = vadd.f32 %v1040, %v1068
      %1070 = vmatmul.bf16.gmra.mxu0 %v962
      %v1071 = vpop.f32.mrf.mxu0
      %v1072 = vadd.f32 %v1043, %v1071
      %v1073 = vpop.f32.mrf.mxu0
      %v1074 = vadd.f32 %v1045, %v1073
      %1075 = vmatmul.bf16.gmra.mxu0 %v965
      %v1076 = vpop.f32.mrf.mxu0
      %v1077 = vadd.f32 %v1048, %v1076
      %v1078 = vpop.f32.mrf.mxu0
      %v1079 = vadd.f32 %v1050, %v1078
      %1080 = vmatmul.bf16.gmra.mxu0 %v968
      %v1081 = vpop.f32.mrf.mxu0
      %v1082 = vadd.f32 %v1053, %v1081
      %v1083 = vpop.f32.mrf.mxu0
      %v1084 = vadd.f32 %v1055, %v1083
      %1085 = vdwg.mxu0
      %v1086 = vadd.f32 %v720, %v1009
      %v1087 = vadd.f32 %v778, %v1067
      %v1088 = vadd.f32 %v722, %v1011
      %v1089 = vadd.f32 %v780, %v1069
      %v1090 = vadd.f32 %v725, %v1014
      %v1091 = vadd.f32 %v783, %v1072
      %v1092 = vadd.f32 %v727, %v1016
      %v1093 = vadd.f32 %v785, %v1074
      %v1094 = vadd.f32 %v730, %v1019
      %v1095 = vadd.f32 %v788, %v1077
      %v1096 = vadd.f32 %v732, %v1021
      %v1097 = vadd.f32 %v790, %v1079
      %v1098 = vadd.f32 %v735, %v1024
      %v1099 = vadd.f32 %v793, %v1082
      %v1100 = vadd.f32 %v737, %v1026
      %v1101 = vadd.f32 %v795, %v1084
      %v1102 = vld [vmem:[%s165 + $0x8] sm:$0xcc]
      %v1103 = vld [vmem:[%s165 + $0x10] sm:$0xff]
      %v1104 = vld [vmem:[%s165 + $0x18] sm:$0xff]
      %v1105 = vld [vmem:[%s165 + $0x20] sm:$0xff]
      %v1106 = vld [vmem:[%s165 + $0x28] sm:$0xff]
      %v1107 = vld [vmem:[%s165 + $0x30] sm:$0xff]
      %v1108 = vld [vmem:[%s165 + $0x38] sm:$0xff]
      %v1109 = vld [vmem:[%s165 + $0x40] sm:$0xff]
      %v1110 = vld [vmem:[%s165 + $0x48] sm:$0x33]
      %s1111 = scalar_lea.vmem %s1, 576
      %v1112 = vld [vmem:[%s1111] sm:$0xff]
      %v1113 = vld [vmem:[%s1111 + $0x8] sm:$0xff]
      %v1114 = vld [vmem:[%s1111 + $0x10] sm:$0xff]
      %v1115 = vld [vmem:[%s1111 + $0x18] sm:$0xff]
      %v1116 = vld [vmem:[%s1111 + $0x20] sm:$0xff]
      %v1117 = vld [vmem:[%s1111 + $0x28] sm:$0xff]
      %v1118 = vld [vmem:[%s1111 + $0x30] sm:$0xff]
      %v1119 = vld [vmem:[%s1111 + $0x38] sm:$0xff]
      %v1120 = vld [vmem:[%s1111 + $0x40] sm:$0xff]
      %v1121 = vld [vmem:[%s1111 + $0x48] sm:$0xff]
      %v1122 = vld [vmem:[%s1111 + $0x50] sm:$0xff]
      %v1123 = vld [vmem:[%s1111 + $0x58] sm:$0xff]
      %v1124 = vld [vmem:[%s1111 + $0x60] sm:$0xff]
      %v1125 = vld [vmem:[%s1111 + $0x68] sm:$0xff]
      %v1126 = vld [vmem:[%s1111 + $0x70] sm:$0xff]
      %v1127 = vld [vmem:[%s1111 + $0x78] sm:$0xff]
      %v1128 = vld [vmem:[%s1111 + $0x80] sm:$0xff]
      %v1129 = vld [vmem:[%s1111 + $0x88] sm:$0xff]
      %v1130 = vld [vmem:[%s1111 + $0x90] sm:$0xff]
      %v1131 = vld [vmem:[%s1111 + $0x98] sm:$0xff]
      %v1132 = vld [vmem:[%s1111 + $0xa0] sm:$0xff]
      %v1133 = vld [vmem:[%s1111 + $0xa8] sm:$0xff]
      %v1134 = vld [vmem:[%s1111 + $0xb0] sm:$0xff]
      %v1135 = vld [vmem:[%s1111 + $0xb8] sm:$0xff]
      %v1145 = vunpack.c.l.b16 %v1102
      %v1146 = vunpack.c.h.b16 %v1102
      %v1147 = vunpack.c.l.b16 %v1103
      %v1148 = vunpack.c.h.b16 %v1103
      %v1149 = vunpack.c.l.b16 %v1104
      %v1150 = vunpack.c.h.b16 %v1104
      %v1151 = vunpack.c.l.b16 %v1105
      %v1152 = vunpack.c.h.b16 %v1105
      %v1153 = vunpack.c.l.b16 %v1106
      %v1154 = vunpack.c.h.b16 %v1106
      %v1155 = vunpack.c.l.b16 %v1107
      %v1156 = vunpack.c.h.b16 %v1107
      %v1157 = vunpack.c.l.b16 %v1108
      %v1158 = vunpack.c.h.b16 %v1108
      %v1159 = vunpack.c.l.b16 %v1109
      %v1160 = vunpack.c.h.b16 %v1109
      %v1161 = vunpack.c.l.b16 %v1110
      %v1162 = vunpack.c.h.b16 %v1110
      %v1163 = vpack.c.b16 %v1147, %v1145
      %v1164 = vpack.c.b16 %v1148, %v1146
      %v1165 = vpack.c.b16 %v1151, %v1149
      %v1166 = vpack.c.b16 %v1152, %v1150
      %v1167 = vpack.c.b16 %v1155, %v1153
      %v1168 = vpack.c.b16 %v1156, %v1154
      %v1169 = vpack.c.b16 %v1159, %v1157
      %v1170 = vpack.c.b16 %v1160, %v1158
      %v1171 = vpack.c.b16 %v1161, %v1161
      %v1172 = vpack.c.b16 %v1162, %v1162
      %v1173 = vrot.slane %v1163, 2
      %v1174 = vrot.slane %v1165, 2
      %v1175 = vsel %vm268, %v1173, %v1174
      %v1176 = vrot.slane %v1164, 2
      %v1177 = vrot.slane %v1166, 2
      %v1178 = vsel %vm268, %v1176, %v1177
      %v1179 = vrot.slane %v1167, 2
      %v1180 = vsel %vm268, %v1174, %v1179
      %v1181 = vrot.slane %v1168, 2
      %v1182 = vsel %vm268, %v1177, %v1181
      %v1183 = vrot.slane %v1169, 2
      %v1184 = vsel %vm268, %v1179, %v1183
      %v1185 = vrot.slane %v1170, 2
      %v1186 = vsel %vm268, %v1181, %v1185
      %v1187 = vrot.slane %v1171, 2
      %v1188 = vsel %vm268, %v1183, %v1187
      %v1189 = vrot.slane %v1172, 2
      %v1190 = vsel %vm268, %v1185, %v1189
      %v1219 = vunpack.c.l.b16 %v1112
      %v1220 = vunpack.c.h.b16 %v1112
      %v1221 = vunpack.c.l.b16 %v1113
      %v1222 = vunpack.c.h.b16 %v1113
      %v1223 = vunpack.c.l.b16 %v1114
      %v1224 = vunpack.c.h.b16 %v1114
      %v1225 = vunpack.c.l.b16 %v1115
      %v1226 = vunpack.c.h.b16 %v1115
      %v1227 = vunpack.c.l.b16 %v1116
      %v1228 = vunpack.c.h.b16 %v1116
      %v1229 = vunpack.c.l.b16 %v1117
      %v1230 = vunpack.c.h.b16 %v1117
      %v1231 = vunpack.c.l.b16 %v1118
      %v1232 = vunpack.c.h.b16 %v1118
      %v1233 = vunpack.c.l.b16 %v1119
      %v1234 = vunpack.c.h.b16 %v1119
      %v1235 = vunpack.c.l.b16 %v1120
      %v1236 = vunpack.c.h.b16 %v1120
      %v1237 = vunpack.c.l.b16 %v1121
      %v1238 = vunpack.c.h.b16 %v1121
      %v1239 = vunpack.c.l.b16 %v1122
      %v1240 = vunpack.c.h.b16 %v1122
      %v1241 = vunpack.c.l.b16 %v1123
      %v1242 = vunpack.c.h.b16 %v1123
      %v1243 = vunpack.c.l.b16 %v1124
      %v1244 = vunpack.c.h.b16 %v1124
      %v1245 = vunpack.c.l.b16 %v1125
      %v1246 = vunpack.c.h.b16 %v1125
      %v1247 = vunpack.c.l.b16 %v1126
      %v1248 = vunpack.c.h.b16 %v1126
      %v1249 = vunpack.c.l.b16 %v1127
      %v1250 = vunpack.c.h.b16 %v1127
      %v1251 = vunpack.c.l.b16 %v1128
      %v1252 = vunpack.c.h.b16 %v1128
      %v1253 = vunpack.c.l.b16 %v1129
      %v1254 = vunpack.c.h.b16 %v1129
      %v1255 = vunpack.c.l.b16 %v1130
      %v1256 = vunpack.c.h.b16 %v1130
      %v1257 = vunpack.c.l.b16 %v1131
      %v1258 = vunpack.c.h.b16 %v1131
      %v1259 = vunpack.c.l.b16 %v1132
      %v1260 = vunpack.c.h.b16 %v1132
      %v1261 = vunpack.c.l.b16 %v1133
      %v1262 = vunpack.c.h.b16 %v1133
      %v1263 = vunpack.c.l.b16 %v1134
      %v1264 = vunpack.c.h.b16 %v1134
      %v1265 = vunpack.c.l.b16 %v1135
      %v1266 = vunpack.c.h.b16 %v1135
      %v1267 = vpack.c.b16 %v1221, %v1219
      %v1268 = vpack.c.b16 %v1222, %v1220
      %v1269 = vpack.c.b16 %v1225, %v1223
      %v1270 = vpack.c.b16 %v1226, %v1224
      %v1271 = vpack.c.b16 %v1229, %v1227
      %v1272 = vpack.c.b16 %v1230, %v1228
      %v1273 = vpack.c.b16 %v1233, %v1231
      %v1274 = vpack.c.b16 %v1234, %v1232
      %v1275 = vpack.c.b16 %v1237, %v1235
      %v1276 = vpack.c.b16 %v1238, %v1236
      %v1277 = vpack.c.b16 %v1241, %v1239
      %v1278 = vpack.c.b16 %v1242, %v1240
      %v1279 = vpack.c.b16 %v1245, %v1243
      %v1280 = vpack.c.b16 %v1246, %v1244
      %v1281 = vpack.c.b16 %v1249, %v1247
      %v1282 = vpack.c.b16 %v1250, %v1248
      %v1283 = vpack.c.b16 %v1253, %v1251
      %v1284 = vpack.c.b16 %v1254, %v1252
      %v1285 = vpack.c.b16 %v1257, %v1255
      %v1286 = vpack.c.b16 %v1258, %v1256
      %v1287 = vpack.c.b16 %v1261, %v1259
      %v1288 = vpack.c.b16 %v1262, %v1260
      %v1289 = vpack.c.b16 %v1265, %v1263
      %v1290 = vpack.c.b16 %v1266, %v1264
      %v1316 = vsel %vm411, %v1178, 0
      %v1319 = vsel %vm411, %v1182, 0
      %v1322 = vsel %vm411, %v1186, 0
      %v1325 = vsel %vm411, %v1190, 0
      %1327 = vmatpush.bf16.msra.mxu0 %v1281
      %1328 = vmatpush.bf16.msra.mxu0 %v1279
      %1329 = vmatpush.bf16.msra.mxu0 %v1277
      %1330 = vmatpush.bf16.msra.mxu0 %v1275
      %1331 = vmatpush.bf16.msra.mxu0 %v1273
      %1332 = vmatpush.bf16.msra.mxu0 %v1271
      %1333 = vmatpush.bf16.msra.mxu0 %v1269
      %1334 = vmatpush.bf16.msra.mxu0 %v1267
      %1335 = vmatmul.bf16.gmra.mxu0 %v1175
      %v1336 = vpop.f32.mrf.mxu0
      %v1337 = vadd.f32 0.0, %v1336
      %v1338 = vpop.f32.mrf.mxu0
      %v1339 = vadd.f32 0.0, %v1338
      %1340 = vmatmul.bf16.gmra.mxu0 %v1180
      %v1341 = vpop.f32.mrf.mxu0
      %v1342 = vadd.f32 0.0, %v1341
      %v1343 = vpop.f32.mrf.mxu0
      %v1344 = vadd.f32 0.0, %v1343
      %1345 = vmatmul.bf16.gmra.mxu0 %v1184
      %v1346 = vpop.f32.mrf.mxu0
      %v1347 = vadd.f32 0.0, %v1346
      %v1348 = vpop.f32.mrf.mxu0
      %v1349 = vadd.f32 0.0, %v1348
      %1350 = vmatmul.bf16.gmra.mxu0 %v1188
      %v1351 = vpop.f32.mrf.mxu0
      %v1352 = vadd.f32 0.0, %v1351
      %v1353 = vpop.f32.mrf.mxu0
      %v1354 = vadd.f32 0.0, %v1353
      %1355 = vdwg.mxu0
      %1356 = vmatpush.bf16.msra.mxu0 0
      %1357 = vmatpush.bf16.msra.mxu0 0
      %1358 = vmatpush.bf16.msra.mxu0 0
      %1359 = vmatpush.bf16.msra.mxu0 0
      %1360 = vmatpush.bf16.msra.mxu0 %v1289
      %1361 = vmatpush.bf16.msra.mxu0 %v1287
      %1362 = vmatpush.bf16.msra.mxu0 %v1285
      %1363 = vmatpush.bf16.msra.mxu0 %v1283
      %1364 = vmatmul.bf16.gmra.mxu0 %v1316
      %v1365 = vpop.f32.mrf.mxu0
      %v1366 = vadd.f32 %v1337, %v1365
      %v1367 = vpop.f32.mrf.mxu0
      %v1368 = vadd.f32 %v1339, %v1367
      %1369 = vmatmul.bf16.gmra.mxu0 %v1319
      %v1370 = vpop.f32.mrf.mxu0
      %v1371 = vadd.f32 %v1342, %v1370
      %v1372 = vpop.f32.mrf.mxu0
      %v1373 = vadd.f32 %v1344, %v1372
      %1374 = vmatmul.bf16.gmra.mxu0 %v1322
      %v1375 = vpop.f32.mrf.mxu0
      %v1376 = vadd.f32 %v1347, %v1375
      %v1377 = vpop.f32.mrf.mxu0
      %v1378 = vadd.f32 %v1349, %v1377
      %1379 = vmatmul.bf16.gmra.mxu0 %v1325
      %v1380 = vpop.f32.mrf.mxu0
      %v1381 = vadd.f32 %v1352, %v1380
      %v1382 = vpop.f32.mrf.mxu0
      %v1383 = vadd.f32 %v1354, %v1382
      %1384 = vdwg.mxu0
      %1385 = vmatpush.bf16.msra.mxu0 %v1282
      %1386 = vmatpush.bf16.msra.mxu0 %v1280
      %1387 = vmatpush.bf16.msra.mxu0 %v1278
      %1388 = vmatpush.bf16.msra.mxu0 %v1276
      %1389 = vmatpush.bf16.msra.mxu0 %v1274
      %1390 = vmatpush.bf16.msra.mxu0 %v1272
      %1391 = vmatpush.bf16.msra.mxu0 %v1270
      %1392 = vmatpush.bf16.msra.mxu0 %v1268
      %1393 = vmatmul.bf16.gmra.mxu0 %v1175
      %v1394 = vpop.f32.mrf.mxu0
      %v1395 = vadd.f32 0.0, %v1394
      %v1396 = vpop.f32.mrf.mxu0
      %v1397 = vadd.f32 0.0, %v1396
      %1398 = vmatmul.bf16.gmra.mxu0 %v1180
      %v1399 = vpop.f32.mrf.mxu0
      %v1400 = vadd.f32 0.0, %v1399
      %v1401 = vpop.f32.mrf.mxu0
      %v1402 = vadd.f32 0.0, %v1401
      %1403 = vmatmul.bf16.gmra.mxu0 %v1184
      %v1404 = vpop.f32.mrf.mxu0
      %v1405 = vadd.f32 0.0, %v1404
      %v1406 = vpop.f32.mrf.mxu0
      %v1407 = vadd.f32 0.0, %v1406
      %1408 = vmatmul.bf16.gmra.mxu0 %v1188
      %v1409 = vpop.f32.mrf.mxu0
      %v1410 = vadd.f32 0.0, %v1409
      %v1411 = vpop.f32.mrf.mxu0
      %v1412 = vadd.f32 0.0, %v1411
      %1413 = vdwg.mxu0
      %1414 = vmatpush.bf16.msra.mxu0 0
      %1415 = vmatpush.bf16.msra.mxu0 0
      %1416 = vmatpush.bf16.msra.mxu0 0
      %1417 = vmatpush.bf16.msra.mxu0 0
      %1418 = vmatpush.bf16.msra.mxu0 %v1290
      %1419 = vmatpush.bf16.msra.mxu0 %v1288
      %1420 = vmatpush.bf16.msra.mxu0 %v1286
      %1421 = vmatpush.bf16.msra.mxu0 %v1284
      %1422 = vmatmul.bf16.gmra.mxu0 %v1316
      %v1423 = vpop.f32.mrf.mxu0
      %v1424 = vadd.f32 %v1395, %v1423
      %v1425 = vpop.f32.mrf.mxu0
      %v1426 = vadd.f32 %v1397, %v1425
      %1427 = vmatmul.bf16.gmra.mxu0 %v1319
      %v1428 = vpop.f32.mrf.mxu0
      %v1429 = vadd.f32 %v1400, %v1428
      %v1430 = vpop.f32.mrf.mxu0
      %v1431 = vadd.f32 %v1402, %v1430
      %1432 = vmatmul.bf16.gmra.mxu0 %v1322
      %v1433 = vpop.f32.mrf.mxu0
      %v1434 = vadd.f32 %v1405, %v1433
      %v1435 = vpop.f32.mrf.mxu0
      %v1436 = vadd.f32 %v1407, %v1435
      %1437 = vmatmul.bf16.gmra.mxu0 %v1325
      %v1438 = vpop.f32.mrf.mxu0
      %v1439 = vadd.f32 %v1410, %v1438
      %v1440 = vpop.f32.mrf.mxu0
      %v1441 = vadd.f32 %v1412, %v1440
      %1442 = vdwg.mxu0
      %v1443 = vadd.f32 %v1086, %v1366
      %v1444 = vadd.f32 %v1087, %v1424
      %v1445 = vadd.f32 %v1088, %v1368
      %v1446 = vadd.f32 %v1089, %v1426
      %v1447 = vadd.f32 %v1090, %v1371
      %v1448 = vadd.f32 %v1091, %v1429
      %v1449 = vadd.f32 %v1092, %v1373
      %v1450 = vadd.f32 %v1093, %v1431
      %v1451 = vadd.f32 %v1094, %v1376
      %v1452 = vadd.f32 %v1095, %v1434
      %v1453 = vadd.f32 %v1096, %v1378
      %v1454 = vadd.f32 %v1097, %v1436
      %v1455 = vadd.f32 %v1098, %v1381
      %v1456 = vadd.f32 %v1099, %v1439
      %v1457 = vadd.f32 %v1100, %v1383
      %v1458 = vadd.f32 %v1101, %v1441
      %v1459 = vld [vmem:[%s2] sm:$0x3]
      %v1461 = vperm.slane %v1459, 0
      %v1462 = vperm.slane %v1459, 1
      %v1465 = vadd.f32 %v1443, %v1461
      %v1466 = vadd.f32 %v1444, %v1462
      %v1467 = vadd.f32 %v1445, %v1461
      %v1468 = vadd.f32 %v1446, %v1462
      %v1469 = vadd.f32 %v1447, %v1461
      %v1470 = vadd.f32 %v1448, %v1462
      %v1471 = vadd.f32 %v1449, %v1461
      %v1472 = vadd.f32 %v1450, %v1462
      %v1473 = vadd.f32 %v1451, %v1461
      %v1474 = vadd.f32 %v1452, %v1462
      %v1475 = vadd.f32 %v1453, %v1461
      %v1476 = vadd.f32 %v1454, %v1462
      %v1477 = vadd.f32 %v1455, %v1461
      %v1478 = vadd.f32 %v1456, %v1462
      %v1479 = vadd.f32 %v1457, %v1461
      %v1480 = vadd.f32 %v1458, %v1462
      %v1481 = vmax.f32 %v1465, 0.0
      %v1482 = vmax.f32 %v1466, 0.0
      %v1483 = vmax.f32 %v1467, 0.0
      %v1484 = vmax.f32 %v1468, 0.0
      %v1485 = vmax.f32 %v1469, 0.0
      %v1486 = vmax.f32 %v1470, 0.0
      %v1487 = vmax.f32 %v1471, 0.0
      %v1488 = vmax.f32 %v1472, 0.0
      %v1489 = vmax.f32 %v1473, 0.0
      %v1490 = vmax.f32 %v1474, 0.0
      %v1491 = vmax.f32 %v1475, 0.0
      %v1492 = vmax.f32 %v1476, 0.0
      %v1493 = vmax.f32 %v1477, 0.0
      %v1494 = vmax.f32 %v1478, 0.0
      %v1495 = vmax.f32 %v1479, 0.0
      %v1496 = vmax.f32 %v1480, 0.0
      %vm1505 = vcmask 1040384
      %v1506 = vrot.slane %v1482, 7
      %v1507 = vrot.slane %v1484, 7
      %v1508 = vsel %vm1505, %v1506, %v1507
      %v1509 = vrot.slane %v1486, 7
      %v1510 = vsel %vm1505, %v1507, %v1509
      %v1511 = vrot.slane %v1488, 7
      %v1512 = vsel %vm1505, %v1509, %v1511
      %v1513 = vrot.slane %v1490, 7
      %v1514 = vsel %vm1505, %v1511, %v1513
      %v1515 = vrot.slane %v1492, 7
      %v1516 = vsel %vm1505, %v1513, %v1515
      %v1517 = vrot.slane %v1494, 7
      %v1518 = vsel %vm1505, %v1515, %v1517
      %v1519 = vrot.slane %v1496, 7
      %v1520 = vsel %vm1505, %v1517, %v1519
      %1521 = vrot.lane.b32.xlu0 %v1506, 64
      %v1522 = vpop.permute.xlu0 %1521
      %1523 = vrot.lane.b32.xlu0 %v1508, 64
      %v1524 = vpop.permute.xlu0 %1523
      %1525 = vrot.lane.b32.xlu0 %v1510, 64
      %v1526 = vpop.permute.xlu0 %1525
      %1527 = vrot.lane.b32.xlu0 %v1512, 64
      %v1528 = vpop.permute.xlu0 %1527
      %1529 = vrot.lane.b32.xlu0 %v1514, 64
      %v1530 = vpop.permute.xlu0 %1529
      %1531 = vrot.lane.b32.xlu0 %v1516, 64
      %v1532 = vpop.permute.xlu0 %1531
      %1533 = vrot.lane.b32.xlu0 %v1518, 64
      %v1534 = vpop.permute.xlu0 %1533
      %1535 = vrot.lane.b32.xlu0 %v1520, 64
      %v1536 = vpop.permute.xlu0 %1535
      %v1545 = vsel %vm1505, 0.0, %v1522
      %v1546 = vlaneseq
      %v1547 = vshrl.u32 %v1546, 7
      %v1548 = vadd.s32 %v1547, 8
      %v1549 = vadd.s32 %v1547, 16
      %v1550 = vadd.s32 %v1547, 24
      %v1551 = vadd.s32 %v1547, 32
      %v1552 = vadd.s32 %v1547, 40
      %v1553 = vadd.s32 %v1547, 48
      %v1554 = vadd.s32 %v1547, 56
      %vm1555 = vcmp.lt.s32.totalorder %v1547, 0
      %v1556 = vsub.s32 0, %v1547
      %v1557 = vsel %vm1555, %v1556, %v1547
      %v1558 = vshrl.u32 %v1557, 2
      %v1559 = vand.u32 %v1557, 3
      %v1560 = vsub.s32 0, %v1559
      %v1561 = vsel %vm1555, %v1560, %v1559
      %vm1562 = vcmp.lt.s32.totalorder %v1548, 0
      %v1563 = vsub.s32 0, %v1548
      %v1564 = vsel %vm1562, %v1563, %v1548
      %v1565 = vshrl.u32 %v1564, 2
      %v1566 = vand.u32 %v1564, 3
      %v1567 = vsub.s32 0, %v1566
      %v1568 = vsel %vm1562, %v1567, %v1566
      %vm1569 = vcmp.lt.s32.totalorder %v1549, 0
      %v1570 = vsub.s32 0, %v1549
      %v1571 = vsel %vm1569, %v1570, %v1549
      %v1572 = vshrl.u32 %v1571, 2
      %v1573 = vand.u32 %v1571, 3
      %v1574 = vsub.s32 0, %v1573
      %v1575 = vsel %vm1569, %v1574, %v1573
      %vm1576 = vcmp.lt.s32.totalorder %v1550, 0
      %v1577 = vsub.s32 0, %v1550
      %v1578 = vsel %vm1576, %v1577, %v1550
      %v1579 = vshrl.u32 %v1578, 2
      %v1580 = vand.u32 %v1578, 3
      %v1581 = vsub.s32 0, %v1580
      %v1582 = vsel %vm1576, %v1581, %v1580
      %vm1583 = vcmp.lt.s32.totalorder %v1551, 0
      %v1584 = vsub.s32 0, %v1551
      %v1585 = vsel %vm1583, %v1584, %v1551
      %v1586 = vshrl.u32 %v1585, 2
      %v1587 = vand.u32 %v1585, 3
      %v1588 = vsub.s32 0, %v1587
      %v1589 = vsel %vm1583, %v1588, %v1587
      %vm1590 = vcmp.lt.s32.totalorder %v1552, 0
      %v1591 = vsub.s32 0, %v1552
      %v1592 = vsel %vm1590, %v1591, %v1552
      %v1593 = vshrl.u32 %v1592, 2
      %v1594 = vand.u32 %v1592, 3
      %v1595 = vsub.s32 0, %v1594
      %v1596 = vsel %vm1590, %v1595, %v1594
      %vm1597 = vcmp.lt.s32.totalorder %v1553, 0
      %v1598 = vsub.s32 0, %v1553
      %v1599 = vsel %vm1597, %v1598, %v1553
      %v1600 = vshrl.u32 %v1599, 2
      %v1601 = vand.u32 %v1599, 3
      %v1602 = vsub.s32 0, %v1601
      %v1603 = vsel %vm1597, %v1602, %v1601
      %vm1604 = vcmp.lt.s32.totalorder %v1554, 0
      %v1605 = vsub.s32 0, %v1554
      %v1606 = vsel %vm1604, %v1605, %v1554
      %v1607 = vshrl.u32 %v1606, 2
      %v1608 = vand.u32 %v1606, 3
      %v1609 = vsub.s32 0, %v1608
      %v1610 = vsel %vm1604, %v1609, %v1608
      %vm1611 = vcmp.ne.s32.totalorder %v1561, 0
      %vm1612 = vcmp.ne.s32.totalorder %v1568, 0
      %vm1613 = vcmp.ne.s32.totalorder %v1575, 0
      %vm1614 = vcmp.ne.s32.totalorder %v1582, 0
      %vm1615 = vcmp.ne.s32.totalorder %v1589, 0
      %vm1616 = vcmp.ne.s32.totalorder %v1596, 0
      %vm1617 = vcmp.ne.s32.totalorder %v1603, 0
      %vm1618 = vcmp.ne.s32.totalorder %v1610, 0
      %vm1619 = vcmp.lt.s32.totalorder %v1561, 0
      %vm1620 = vcmp.lt.s32.totalorder %v1568, 0
      %vm1621 = vcmp.lt.s32.totalorder %v1575, 0
      %vm1622 = vcmp.lt.s32.totalorder %v1582, 0
      %vm1623 = vcmp.lt.s32.totalorder %v1589, 0
      %vm1624 = vcmp.lt.s32.totalorder %v1596, 0
      %vm1625 = vcmp.lt.s32.totalorder %v1603, 0
      %vm1626 = vcmp.lt.s32.totalorder %v1610, 0
      %vm1627 = vmand %vm1619, %vm1611
      %vm1628 = vmand %vm1620, %vm1612
      %vm1629 = vmand %vm1621, %vm1613
      %vm1630 = vmand %vm1622, %vm1614
      %vm1631 = vmand %vm1623, %vm1615
      %vm1632 = vmand %vm1624, %vm1616
      %vm1633 = vmand %vm1625, %vm1617
      %vm1634 = vmand %vm1626, %vm1618
      %v1635 = vadd.s32 %v1561, 4
      %v1636 = vadd.s32 %v1568, 4
      %v1637 = vadd.s32 %v1575, 4
      %v1638 = vadd.s32 %v1582, 4
      %v1639 = vadd.s32 %v1589, 4
      %v1640 = vadd.s32 %v1596, 4
      %v1641 = vadd.s32 %v1603, 4
      %v1642 = vadd.s32 %v1610, 4
      %v1643 = vsel %vm1627, %v1635, %v1561
      %v1644 = vsel %vm1628, %v1636, %v1568
      %v1645 = vsel %vm1629, %v1637, %v1575
      %v1646 = vsel %vm1630, %v1638, %v1582
      %v1647 = vsel %vm1631, %v1639, %v1589
      %v1648 = vsel %vm1632, %v1640, %v1596
      %v1649 = vsel %vm1633, %v1641, %v1603
      %v1650 = vsel %vm1634, %v1642, %v1610
      %vm1651 = vcmp.eq.s32.totalorder %v1643, 0
      %vm1652 = vcmp.eq.s32.totalorder %v1644, 0
      %vm1653 = vcmp.eq.s32.totalorder %v1645, 0
      %vm1654 = vcmp.eq.s32.totalorder %v1646, 0
      %vm1655 = vcmp.eq.s32.totalorder %v1647, 0
      %vm1656 = vcmp.eq.s32.totalorder %v1648, 0
      %vm1657 = vcmp.eq.s32.totalorder %v1649, 0
      %vm1658 = vcmp.eq.s32.totalorder %v1650, 0
      %v1659 = vsel %vm1651, 1, 0
      %v1660 = vsel %vm1652, 1, 0
      %v1661 = vsel %vm1653, 1, 0
      %v1662 = vsel %vm1654, 1, 0
      %v1663 = vsel %vm1655, 1, 0
      %v1664 = vsel %vm1656, 1, 0
      %v1665 = vsel %vm1657, 1, 0
      %v1666 = vsel %vm1658, 1, 0
      %vm1667 = vcmp.eq.s32.totalorder %v1659, 1
      %vm1668 = vcmp.eq.s32.totalorder %v1660, 1
      %vm1669 = vcmp.eq.s32.totalorder %v1661, 1
      %vm1670 = vcmp.eq.s32.totalorder %v1662, 1
      %vm1671 = vcmp.eq.s32.totalorder %v1663, 1
      %vm1672 = vcmp.eq.s32.totalorder %v1664, 1
      %vm1673 = vcmp.eq.s32.totalorder %v1665, 1
      %vm1674 = vcmp.eq.s32.totalorder %v1666, 1
      %v1675 = vsel %vm1667, 0.0, %v1545
      %v1676 = vsel %vm1668, 0.0, %v1524
      %v1677 = vsel %vm1669, 0.0, %v1526
      %v1678 = vsel %vm1670, 0.0, %v1528
      %v1679 = vsel %vm1671, 0.0, %v1530
      %v1680 = vsel %vm1672, 0.0, %v1532
      %v1681 = vsel %vm1673, 0.0, %v1534
      %v1682 = vsel %vm1674, 0.0, %v1536
      %v1683 = vmax.f32 %v1675, %v1481
      %v1684 = vmax.f32 %v1676, %v1483
      %v1685 = vmax.f32 %v1677, %v1485
      %v1686 = vmax.f32 %v1678, %v1487
      %v1687 = vmax.f32 %v1679, %v1489
      %v1688 = vmax.f32 %v1680, %v1491
      %v1689 = vmax.f32 %v1681, %v1493
      %v1690 = vmax.f32 %v1682, %v1495
      %1699 = vrot.lane.b32.xlu0 %v1481, 64
      %v1700 = vpop.permute.xlu0 %1699
      %1701 = vrot.lane.b32.xlu0 %v1483, 64
      %v1702 = vpop.permute.xlu0 %1701
      %1703 = vrot.lane.b32.xlu0 %v1485, 64
      %v1704 = vpop.permute.xlu0 %1703
      %1705 = vrot.lane.b32.xlu0 %v1487, 64
      %v1706 = vpop.permute.xlu0 %1705
      %1707 = vrot.lane.b32.xlu0 %v1489, 64
      %v1708 = vpop.permute.xlu0 %1707
      %1709 = vrot.lane.b32.xlu0 %v1491, 64
      %v1710 = vpop.permute.xlu0 %1709
      %1711 = vrot.lane.b32.xlu0 %v1493, 64
      %v1712 = vpop.permute.xlu0 %1711
      %1713 = vrot.lane.b32.xlu0 %v1495, 64
      %v1714 = vpop.permute.xlu0 %1713
      %v1723 = vmax.f32 %v1683, %v1700
      %v1724 = vmax.f32 %v1684, %v1702
      %v1725 = vmax.f32 %v1685, %v1704
      %v1726 = vmax.f32 %v1686, %v1706
      %v1727 = vmax.f32 %v1687, %v1708
      %v1728 = vmax.f32 %v1688, %v1710
      %v1729 = vmax.f32 %v1689, %v1712
      %v1730 = vmax.f32 %v1690, %v1714
      %1731 = vrot.lane.b32.xlu0 %v1482, 64
      %v1732 = vpop.permute.xlu0 %1731
      %1733 = vrot.lane.b32.xlu0 %v1484, 64
      %v1734 = vpop.permute.xlu0 %1733
      %1735 = vrot.lane.b32.xlu0 %v1486, 64
      %v1736 = vpop.permute.xlu0 %1735
      %1737 = vrot.lane.b32.xlu0 %v1488, 64
      %v1738 = vpop.permute.xlu0 %1737
      %1739 = vrot.lane.b32.xlu0 %v1490, 64
      %v1740 = vpop.permute.xlu0 %1739
      %1741 = vrot.lane.b32.xlu0 %v1492, 64
      %v1742 = vpop.permute.xlu0 %1741
      %1743 = vrot.lane.b32.xlu0 %v1494, 64
      %v1744 = vpop.permute.xlu0 %1743
      %1745 = vrot.lane.b32.xlu0 %v1496, 64
      %v1746 = vpop.permute.xlu0 %1745
      %v1755 = vmax.f32 %v1481, %v1732
      %v1756 = vmax.f32 %v1483, %v1734
      %v1757 = vmax.f32 %v1485, %v1736
      %v1758 = vmax.f32 %v1487, %v1738
      %v1759 = vmax.f32 %v1489, %v1740
      %v1760 = vmax.f32 %v1491, %v1742
      %v1761 = vmax.f32 %v1493, %v1744
      %v1762 = vmax.f32 %v1495, %v1746
      %v1763 = vmax.f32 %v1755, %v1482
      %v1764 = vmax.f32 %v1756, %v1484
      %v1765 = vmax.f32 %v1757, %v1486
      %v1766 = vmax.f32 %v1758, %v1488
      %v1767 = vmax.f32 %v1759, %v1490
      %v1768 = vmax.f32 %v1760, %v1492
      %v1769 = vmax.f32 %v1761, %v1494
      %v1770 = vmax.f32 %v1762, %v1496
      %v1779 = vrot.slane %v1723, 4
      %v1780 = vrot.slane %v1724, 4
      %v1781 = vrot.slane %v1725, 4
      %v1782 = vrot.slane %v1726, 4
      %v1783 = vrot.slane %v1727, 4
      %v1784 = vrot.slane %v1728, 4
      %v1785 = vrot.slane %v1729, 4
      %v1786 = vrot.slane %v1730, 4
      %v1795 = vmax.f32 %v1723, 0.0
      %v1796 = vmax.f32 %v1779, %v1724
      %v1797 = vmax.f32 %v1780, %v1725
      %v1798 = vmax.f32 %v1781, %v1726
      %v1799 = vmax.f32 %v1782, %v1727
      %v1800 = vmax.f32 %v1783, %v1728
      %v1801 = vmax.f32 %v1784, %v1729
      %v1802 = vmax.f32 %v1785, %v1730
      %v1803 = vmax.f32 %v1795, %v1779
      %v1804 = vmax.f32 %v1796, %v1780
      %v1805 = vmax.f32 %v1797, %v1781
      %v1806 = vmax.f32 %v1798, %v1782
      %v1807 = vmax.f32 %v1799, %v1783
      %v1808 = vmax.f32 %v1800, %v1784
      %v1809 = vmax.f32 %v1801, %v1785
      %v1810 = vmax.f32 %v1802, %v1786
      %v1819 = vrot.slane %v1763, 4
      %v1820 = vrot.slane %v1764, 4
      %v1821 = vrot.slane %v1765, 4
      %v1822 = vrot.slane %v1766, 4
      %v1823 = vrot.slane %v1767, 4
      %v1824 = vrot.slane %v1768, 4
      %v1825 = vrot.slane %v1769, 4
      %v1826 = vrot.slane %v1770, 4
      %1827 = vst [vmem:[#allocation1] ss:$2 sm:$0xff] %v1819
      %v1828 = vld.sshfl [vmem:[#allocation1] sm:$0xff pattern:$0x75316420]
      %s1829 = scalar_lea.vmem [#allocation1], 16
      %1830 = vst [vmem:[%s1829] ss:$2 sm:$0xff] %v1820
      %v1831 = vld.sshfl [vmem:[#allocation1 + $0x10] sm:$0xff pattern:$0x75316420]
      %s1832 = scalar_lea.vmem [#allocation1], 32
      %1833 = vst [vmem:[%s1832] ss:$2 sm:$0xff] %v1821
      %v1834 = vld.sshfl [vmem:[#allocation1 + $0x20] sm:$0xff pattern:$0x75316420]
      %s1835 = scalar_lea.vmem [#allocation1], 48
      %1836 = vst [vmem:[%s1835] ss:$2 sm:$0xff] %v1822
      %v1837 = vld.sshfl [vmem:[#allocation1 + $0x30] sm:$0xff pattern:$0x75316420]
      %1838 = vst [vmem:[#allocation1] ss:$2 sm:$0xff] %v1823
      %v1839 = vld.sshfl [vmem:[#allocation1] sm:$0xff pattern:$0x75316420]
      %1840 = vst [vmem:[%s1829] ss:$2 sm:$0xff] %v1824
      %v1841 = vld.sshfl [vmem:[#allocation1 + $0x10] sm:$0xff pattern:$0x75316420]
      %1842 = vst [vmem:[%s1832] ss:$2 sm:$0xff] %v1825
      %v1843 = vld.sshfl [vmem:[#allocation1 + $0x20] sm:$0xff pattern:$0x75316420]
      %1844 = vrot.lane.b32.xlu0 %v1828, 64
      %v1845 = vpop.permute.xlu0 %1844
      %1846 = vrot.lane.b32.xlu0 %v1831, 64
      %v1847 = vpop.permute.xlu0 %1846
      %1848 = vrot.lane.b32.xlu0 %v1834, 64
      %v1849 = vpop.permute.xlu0 %1848
      %1850 = vrot.lane.b32.xlu0 %v1837, 64
      %v1851 = vpop.permute.xlu0 %1850
      %1852 = vrot.lane.b32.xlu0 %v1839, 64
      %v1853 = vpop.permute.xlu0 %1852
      %1854 = vrot.lane.b32.xlu0 %v1841, 64
      %v1855 = vpop.permute.xlu0 %1854
      %1856 = vrot.lane.b32.xlu0 %v1843, 64
      %v1857 = vpop.permute.xlu0 %1856
      %1865 = vst [vmem:[#allocation1] ss:$2 sm:$0xff] %v1763
      %v1866 = vld.sshfl [vmem:[#allocation1] sm:$0xff pattern:$0x75316420]
      %s1867 = scalar_lea.vmem [#allocation1], 16
      %1868 = vst [vmem:[%s1867] ss:$2 sm:$0xff] %v1764
      %v1869 = vld.sshfl [vmem:[#allocation1 + $0x10] sm:$0xff pattern:$0x75316420]
      %s1870 = scalar_lea.vmem [#allocation1], 32
      %1871 = vst [vmem:[%s1870] ss:$2 sm:$0xff] %v1765
      %v1872 = vld.sshfl [vmem:[#allocation1 + $0x20] sm:$0xff pattern:$0x75316420]
      %s1873 = scalar_lea.vmem [#allocation1], 48
      %1874 = vst [vmem:[%s1873] ss:$2 sm:$0xff] %v1766
      %v1875 = vld.sshfl [vmem:[#allocation1 + $0x30] sm:$0xff pattern:$0x75316420]
      %1876 = vst [vmem:[#allocation1] ss:$2 sm:$0xff] %v1767
      %v1877 = vld.sshfl [vmem:[#allocation1] sm:$0xff pattern:$0x75316420]
      %1878 = vst [vmem:[%s1867] ss:$2 sm:$0xff] %v1768
      %v1879 = vld.sshfl [vmem:[#allocation1 + $0x10] sm:$0xff pattern:$0x75316420]
      %1880 = vst [vmem:[%s1870] ss:$2 sm:$0xff] %v1769
      %v1881 = vld.sshfl [vmem:[#allocation1 + $0x20] sm:$0xff pattern:$0x75316420]
      %1882 = vst [vmem:[%s1873] ss:$2 sm:$0xff] %v1770
      %v1883 = vld.sshfl [vmem:[#allocation1 + $0x30] sm:$0xff pattern:$0x75316420]
      %1884 = vrot.lane.b32.xlu0 %v1866, 64
      %v1885 = vpop.permute.xlu0 %1884
      %1886 = vrot.lane.b32.xlu0 %v1869, 64
      %v1887 = vpop.permute.xlu0 %1886
      %1888 = vrot.lane.b32.xlu0 %v1872, 64
      %v1889 = vpop.permute.xlu0 %1888
      %1890 = vrot.lane.b32.xlu0 %v1875, 64
      %v1891 = vpop.permute.xlu0 %1890
      %1892 = vrot.lane.b32.xlu0 %v1877, 64
      %v1893 = vpop.permute.xlu0 %1892
      %1894 = vrot.lane.b32.xlu0 %v1879, 64
      %v1895 = vpop.permute.xlu0 %1894
      %1896 = vrot.lane.b32.xlu0 %v1881, 64
      %v1897 = vpop.permute.xlu0 %1896
      %1898 = vrot.lane.b32.xlu0 %v1883, 64
      %v1899 = vpop.permute.xlu0 %1898
      %v1908 = vmax.f32 %v1885, 0.0
      %v1909 = vmax.f32 %v1845, %v1887
      %v1910 = vmax.f32 %v1847, %v1889
      %v1911 = vmax.f32 %v1849, %v1891
      %v1912 = vmax.f32 %v1851, %v1893
      %v1913 = vmax.f32 %v1853, %v1895
      %v1914 = vmax.f32 %v1855, %v1897
      %v1915 = vmax.f32 %v1857, %v1899
      %1916 = vst [vmem:[#allocation1] ss:$2 sm:$0xff] %v1819
      %v1917 = vld.sshfl [vmem:[#allocation1] sm:$0xff pattern:$0x75316420]
      %s1918 = scalar_lea.vmem [#allocation1], 16
      %1919 = vst [vmem:[%s1918] ss:$2 sm:$0xff] %v1820
      %v1920 = vld.sshfl [vmem:[#allocation1 + $0x10] sm:$0xff pattern:$0x75316420]
      %s1921 = scalar_lea.vmem [#allocation1], 32
      %1922 = vst [vmem:[%s1921] ss:$2 sm:$0xff] %v1821
      %v1923 = vld.sshfl [vmem:[#allocation1 + $0x20] sm:$0xff pattern:$0x75316420]
      %s1924 = scalar_lea.vmem [#allocation1], 48
      %1925 = vst [vmem:[%s1924] ss:$2 sm:$0xff] %v1822
      %v1926 = vld.sshfl [vmem:[#allocation1 + $0x30] sm:$0xff pattern:$0x75316420]
      %1927 = vst [vmem:[#allocation1] ss:$2 sm:$0xff] %v1823
      %v1928 = vld.sshfl [vmem:[#allocation1] sm:$0xff pattern:$0x75316420]
      %1929 = vst [vmem:[%s1918] ss:$2 sm:$0xff] %v1824
      %v1930 = vld.sshfl [vmem:[#allocation1 + $0x10] sm:$0xff pattern:$0x75316420]
      %1931 = vst [vmem:[%s1921] ss:$2 sm:$0xff] %v1825
      %v1932 = vld.sshfl [vmem:[#allocation1 + $0x20] sm:$0xff pattern:$0x75316420]
      %1933 = vst [vmem:[%s1924] ss:$2 sm:$0xff] %v1826
      %v1934 = vld.sshfl [vmem:[#allocation1 + $0x30] sm:$0xff pattern:$0x75316420]
      %1935 = vrot.lane.b32.xlu0 %v1917, 64
      %v1936 = vpop.permute.xlu0 %1935
      %1937 = vrot.lane.b32.xlu0 %v1920, 64
      %v1938 = vpop.permute.xlu0 %1937
      %1939 = vrot.lane.b32.xlu0 %v1923, 64
      %v1940 = vpop.permute.xlu0 %1939
      %1941 = vrot.lane.b32.xlu0 %v1926, 64
      %v1942 = vpop.permute.xlu0 %1941
      %1943 = vrot.lane.b32.xlu0 %v1928, 64
      %v1944 = vpop.permute.xlu0 %1943
      %1945 = vrot.lane.b32.xlu0 %v1930, 64
      %v1946 = vpop.permute.xlu0 %1945
      %1947 = vrot.lane.b32.xlu0 %v1932, 64
      %v1948 = vpop.permute.xlu0 %1947
      %1949 = vrot.lane.b32.xlu0 %v1934, 64
      %v1950 = vpop.permute.xlu0 %1949
      %v1959 = vmax.f32 %v1908, %v1936
      %v1960 = vmax.f32 %v1909, %v1938
      %v1961 = vmax.f32 %v1910, %v1940
      %v1962 = vmax.f32 %v1911, %v1942
      %v1963 = vmax.f32 %v1912, %v1944
      %v1964 = vmax.f32 %v1913, %v1946
      %v1965 = vmax.f32 %v1914, %v1948
      %v1966 = vmax.f32 %v1915, %v1950
      %1975 = vrot.lane.b32.xlu0 %v1959, 64
      %v1976 = vpop.permute.xlu0 %1975
      %1977 = vrot.lane.b32.xlu0 %v1960, 64
      %v1978 = vpop.permute.xlu0 %1977
      %1979 = vrot.lane.b32.xlu0 %v1961, 64
      %v1980 = vpop.permute.xlu0 %1979
      %1981 = vrot.lane.b32.xlu0 %v1962, 64
      %v1982 = vpop.permute.xlu0 %1981
      %1983 = vrot.lane.b32.xlu0 %v1963, 64
      %v1984 = vpop.permute.xlu0 %1983
      %1985 = vrot.lane.b32.xlu0 %v1964, 64
      %v1986 = vpop.permute.xlu0 %1985
      %1987 = vrot.lane.b32.xlu0 %v1965, 64
      %v1988 = vpop.permute.xlu0 %1987
      %1989 = vrot.lane.b32.xlu0 %v1966, 64
      %v1990 = vpop.permute.xlu0 %1989
      %v1999 = vsel %vm411, %v1803, %v1976
      %v2000 = vsel %vm411, %v1804, %v1978
      %v2001 = vsel %vm411, %v1805, %v1980
      %v2002 = vsel %vm411, %v1806, %v1982
      %v2003 = vsel %vm411, %v1807, %v1984
      %v2004 = vsel %vm411, %v1808, %v1986
      %v2005 = vsel %vm411, %v1809, %v1988
      %v2006 = vsel %vm411, %v1810, %v1990
      %2015 = vst [vmem:[#allocation1] ss:$2 sm:$0xff] %v1999
      %s2016 = scalar_lea.vmem [#allocation1], 1
      %2017 = vst [vmem:[%s2016] ss:$2 sm:$0xff] %v2000
      %s2018 = scalar_lea.vmem [#allocation1], 16
      %2019 = vst [vmem:[%s2018] ss:$2 sm:$0xff] %v2001
      %s2020 = scalar_lea.vmem [#allocation1], 17
      %2021 = vst [vmem:[%s2020] ss:$2 sm:$0xff] %v2002
      %s2022 = scalar_lea.vmem [#allocation1], 32
      %2023 = vst [vmem:[%s2022] ss:$2 sm:$0xff] %v2003
      %s2024 = scalar_lea.vmem [#allocation1], 33
      %2025 = vst [vmem:[%s2024] ss:$2 sm:$0xff] %v2004
      %s2026 = scalar_lea.vmem [#allocation1], 48
      %2027 = vst [vmem:[%s2026] ss:$2 sm:$0xff] %v2005
      %s2028 = scalar_lea.vmem [#allocation1], 49
      %2029 = vst [vmem:[%s2028] ss:$2 sm:$0xff] %v2006
      %v2030 = vld.sshfl [vmem:[#allocation1] sm:$0xff pattern:$0x75316420]
      %v2031 = vld.sshfl [vmem:[#allocation1 + $0x10] sm:$0xff pattern:$0x75316420]
      %v2032 = vld.sshfl [vmem:[#allocation1 + $0x20] sm:$0xff pattern:$0x75316420]
      %v2033 = vld.sshfl [vmem:[#allocation1 + $0x30] sm:$0xff pattern:$0x75316420]
      %2038 = vst [vmem:[%s170] sm:$0xff] %v2030
      %2039 = vst [vmem:[%s170 + $0x8] sm:$0xff] %v2031
      %2040 = vst [vmem:[%s170 + $0x10] sm:$0xff] %v2032
      %2041 = vst [vmem:[%s170 + $0x18] sm:$0xff] %v2033
      %p2042 = scmp.lt.s32.totalorder %s14, 1
      %s2043 = scalar_select %p2042, %s14, 1
      %s2044 = smul.addr %s2043, 4
      %s2045 = smul.addr %s2044, 8
      %s2046 = scalar_lea.vmem %s3, %s2045
      // Predicated region
      $region33: #{thermal_module_forward.1} parent=31 // pred_check
        %p2047 = pneg %p100
      $region34: #{thermal_module_forward.1} parent=31 // pred_check_branch
        %2049 = sbr.rel (%p2047) target = $region36
      $region35: #{thermal_module_forward.1} parent=31 // pred_region
        _
      $region36: #{thermal_module_forward.1} parent=31 // pred_fallthru
        _
    $region32: #{thermal_module_forward.1} parent=5 // pred_fallthru
      _
    %p2050 = scmp.le.s32.totalorder 2, %s9
    // Predicated region
    $region37: #{thermal_module_forward.1} parent=5 // pred_check
      %p2051 = pneg %p2050
    $region38: #{thermal_module_forward.1} parent=5 // pred_check_branch
      %2053 = sbr.rel (%p2051) target = $region40
    $region39: #{thermal_module_forward.1} parent=5 // pred_region
      %s2054 = ssub.s32 %s9, 2
      // Predicated region
      $region41: #{thermal_module_forward.1} parent=39 // pred_check
        %p2055 = pneg %p106
      $region42: #{thermal_module_forward.1} parent=39 // pred_check_branch
        %2057 = sbr.rel (%p2055) target = $region44
      $region43: #{thermal_module_forward.1} parent=39 // pred_region
        %p2058 = scmp.lt.s32.totalorder %s15, 1
        %s2059 = scalar_select %p2058, %s15, 1
        %s2060 = smul.addr %s2059, 4
        %s2061 = smul.addr %s2060, 8
        %s2062 = scalar_lea.vmem %s3, %s2061
      $region44: #{thermal_module_forward.1} parent=39 // pred_fallthru
        _
    $region40: #{thermal_module_forward.1} parent=5 // pred_fallthru
      _
  $region6: #{thermal_module_forward.1} parent=0 // loop_footer
    %s13 = sadd.s32 1, %s9
  $region7: #{thermal_module_forward.1} parent=0 // loop_footer_branch
    %8 = sbr.rel target = $region3
  $region8: #{thermal_module_forward.1} parent=0 // loop_exit
    _

</llo_original>
